<compile_context>
chip_gen: v6e
topology: v6e:2x2x1
jax: 0.10.0
libtpu: 0.0.40
codegen_flags: <defaults>
</compile_context>

<pallas_src>
import functools

import jax
import jax.numpy as jnp
from jax import lax
from jax.experimental import pallas as pl
from jax.experimental.pallas import tpu as pltpu


def _round_up(x, m):
    return (x + m - 1) // m * m


def _sigmoid(z):
    # one EUP op (tanh) + cheap VPU fma instead of exp + full-precision divide
    return 0.5 * (jnp.tanh(0.5 * z) + 1.0)


def _pad_gate_dim(w, h, h_pad):
    """Pad packed gate dim (..., 4*h) -> (..., 4*h_pad), per gate block."""
    if h == h_pad:
        return w
    lead = w.shape[:-1]
    w4 = w.reshape(lead + (4, h))
    pad = [(0, 0)] * (w4.ndim - 1) + [(0, h_pad - h)]
    return jnp.pad(w4, pad).reshape(lead + (4 * h_pad,))


def _vmem_capacity_bytes():
    try:
        return int(pltpu.get_tpu_info().vmem_capacity_bytes)
    except Exception:
        return 64 * 1024 * 1024          # conservative fallback (v7x per-TC)


def _num_batch_shards():
    # v7x has 2 TensorCores per chip: shard the "parallel" batch axis so the
    # second core does useful work.  Single tile on v5e/v6e (1 TC) to avoid
    # duplicated weight residency and extra grid overhead.
    try:
        kind = jax.devices()[0].device_kind.lower()
        if "v7" in kind or "7x" in kind:
            return 2
    except Exception:
        pass
    return 1


def _vmem_estimate(chunk, batch_tile, d_pad, h_pad, cbytes, gx_bytes, out_bytes):
    four_h = 4 * h_pad
    est = 0
    est += 2 * chunk * batch_tile * d_pad * cbytes      # x chunk   (dbl-buffered)
    est += 2 * chunk * batch_tile * h_pad * out_bytes   # out chunk (dbl-buffered)
    est += 2 * batch_tile * h_pad * 4                   # c_out block
    est += (d_pad + h_pad) * four_h * cbytes            # weights (Buffered(1))
    est += four_h * 4                                   # bias
    est += chunk * batch_tile * four_h * gx_bytes       # gx scratch
    est += 2 * batch_tile * h_pad * 4                   # h / c scratch
    return est


def _make_lstm_kernel(seq_len, chunk, hidden_pad, unroll):
    """LSTM-layer kernel for one (batch_tile, time_chunk) grid cell."""
    needs_mask = (seq_len % chunk) != 0

    def kernel(x_ref, wih_ref, whh_ref, b_ref, out_ref, c_out_ref,
               gx_scr, h_scr, c_scr):
        ti = pl.program_id(1)          # time-chunk index ("arbitrary", serial)
        nt = pl.num_programs(1)
        h_dim = hidden_pad

        @pl.when(ti == 0)
        def _init():
            h_scr[...] = jnp.zeros_like(h_scr)
            c_scr[...] = jnp.zeros_like(c_scr)

        # Hoisted input projection: one GEMM for the whole chunk.  The einsum
        # keeps the (t, b) leading dims so no in-kernel reshape copy is made;
        # bias is folded in once per chunk, not per step.
        gx = jnp.einsum("tbd,dg->tbg", x_ref[...], wih_ref[...],
                        preferred_element_type=jnp.float32)
        gx_scr[...] = (gx + b_ref[...]).astype(gx_scr.dtype)

        w_hh = whh_ref[...]

        def step(t, carry):
            h, c = carry
            # only h @ W_hh is on the serial critical path
            z = gx_scr[t].astype(jnp.float32) + jnp.dot(
                h.astype(w_hh.dtype), w_hh, preferred_element_type=jnp.float32)
            i_g = _sigmoid(z[:, 0 * h_dim:1 * h_dim])
            f_g = _sigmoid(z[:, 1 * h_dim:2 * h_dim])
            g_g = jnp.tanh(z[:, 2 * h_dim:3 * h_dim])
            o_g = _sigmoid(z[:, 3 * h_dim:4 * h_dim])
            c_new = f_g * c + i_g * g_g
            h_new = o_g * jnp.tanh(c_new)
            out_ref[t] = h_new.astype(out_ref.dtype)
            if needs_mask:
                valid = (ti * chunk + t) < seq_len
                h_new = jnp.where(valid, h_new, h)
                c_new = jnp.where(valid, c_new, c)
            return h_new, c_new

        # Serial recurrence: true data dependence step-to-step, so a modest
        # unroll (scheduler visibility) without full-unroll vreg blowup.
        h, c = lax.fori_loop(0, chunk, step, (h_scr[...], c_scr[...]),
                             unroll=min(unroll, chunk))
        h_scr[...] = h
        c_scr[...] = c

        @pl.when(ti == nt - 1)
        def _finalize():
            c_out_ref[...] = c

    return kernel


def lstm_layer(x_seq, w_ih, w_hh, b, *, chunk=32, batch_tile=None,
               compute_dtype=jnp.float32, unroll=8):
    """One LSTM layer over a full time-major sequence.

    x_seq : (S, B, D)
    w_ih  : (D, 4H)   packed gate order (i, f, g, o)
    w_hh  : (H, 4H)
    b     : (1, 4H)   b_ih + b_hh, pre-summed
    Returns (out (S,B,H) in compute_dtype, h_final (B,H) f32, c_final (B,H) f32).
    """
    S, B, D = x_seq.shape
    H = w_hh.shape[0]

    Hp = _round_up(H, 128)   # lanes
    Dp = _round_up(D, 128)   # lanes (contraction dim)
    Bp = _round_up(B, 8)     # sublanes

    if batch_tile is None:
        shards = _num_batch_shards()
        if shards > 1 and Bp >= 16:
            batch_tile = _round_up(-(-Bp // shards), 8)
        else:
            batch_tile = Bp
    batch_tile = _round_up(min(batch_tile, Bp), 8)
    Bp = _round_up(Bp, batch_tile)
    nb = Bp // batch_tile

    cbytes = jnp.dtype(compute_dtype).itemsize
    out_dtype = compute_dtype            # bf16 halves inter-layer HBM traffic
    out_bytes = jnp.dtype(out_dtype).itemsize
    gx_dtype = compute_dtype if cbytes < 4 else jnp.float32
    gx_bytes = jnp.dtype(gx_dtype).itemsize

    # Fit the pipeline into VMEM: shrink the time chunk until the estimated
    # footprint fits ~70% of physical VMEM for this generation.
    capacity = _vmem_capacity_bytes()
    budget = int(capacity * 0.7)
    chunk = max(1, min(chunk, S))
    while chunk > 8 and _vmem_estimate(chunk, batch_tile, Dp, Hp, cbytes,
                                       gx_bytes, out_bytes) > budget:
        chunk //= 2
    est = _vmem_estimate(chunk, batch_tile, Dp, Hp, cbytes, gx_bytes, out_bytes)
    vmem_limit = int(min(capacity * 9 // 10,
                         max(est * 14 // 10 + (4 << 20), 32 << 20)))

    Sp = _round_up(S, chunk)
    nt = Sp // chunk

    # Zero-pad activations / per-gate weights; padded hidden columns and
    # padded time steps provably leave the real results untouched.
    x_p = jnp.pad(x_seq, ((0, Sp - S), (0, Bp - B), (0, Dp - D)))
    x_p = x_p.astype(compute_dtype)
    w_ih_p = jnp.pad(_pad_gate_dim(w_ih, H, Hp),
                     ((0, Dp - D), (0, 0))).astype(compute_dtype)
    w_hh_p = jnp.pad(_pad_gate_dim(w_hh, H, Hp),
                     ((0, Hp - H), (0, 0))).astype(compute_dtype)
    b_p = _pad_gate_dim(b, H, Hp).astype(jnp.float32)

    kernel = _make_lstm_kernel(S, chunk, Hp, unroll)

    flops = 2 * Sp * Bp * (Dp + Hp) * 4 * Hp
    transcendentals = 5 * Sp * Bp * Hp
    bytes_accessed = (Sp * Bp * Dp * cbytes + Sp * Bp * Hp * out_bytes
                      + (Dp + Hp) * 4 * Hp * cbytes + 4 * Hp * 4 + Bp * Hp * 4)

    out_p, c_p = pl.pallas_call(
        kernel,
        out_shape=(jax.ShapeDtypeStruct((Sp, Bp, Hp), out_dtype),
                   jax.ShapeDtypeStruct((Bp, Hp), jnp.float32)),
        grid_spec=pltpu.PrefetchScalarGridSpec(
            num_scalar_prefetch=0,
            grid=(nb, nt),
            in_specs=[
                pl.BlockSpec((chunk, batch_tile, Dp),
                             lambda bi, ti: (ti, bi, 0)),
                # constant index_map -> single-buffer the weight slabs
                pl.BlockSpec((Dp, 4 * Hp), lambda bi, ti: (0, 0),
                             pipeline_mode=pl.Buffered(1)),
                pl.BlockSpec((Hp, 4 * Hp), lambda bi, ti: (0, 0),
                             pipeline_mode=pl.Buffered(1)),
                pl.BlockSpec((1, 4 * Hp), lambda bi, ti: (0, 0),
                             pipeline_mode=pl.Buffered(1)),
            ],
            out_specs=(
                pl.BlockSpec((chunk, batch_tile, Hp),
                             lambda bi, ti: (ti, bi, 0)),
                pl.BlockSpec((batch_tile, Hp), lambda bi, ti: (bi, 0)),
            ),
            scratch_shapes=[
                pltpu.VMEM((chunk, batch_tile, 4 * Hp), gx_dtype),   # gx
                pltpu.VMEM((batch_tile, Hp), jnp.float32),           # h carry
                pltpu.VMEM((batch_tile, Hp), jnp.float32),           # c carry
            ],
        ),
        compiler_params=pltpu.CompilerParams(
            dimension_semantics=("parallel", "arbitrary"),
            vmem_limit_bytes=vmem_limit),
        cost_estimate=pl.CostEstimate(flops=flops,
                                      transcendentals=transcendentals,
                                      bytes_accessed=bytes_accessed),
    )(x_p, w_ih_p, w_hh_p, b_p)

    out = out_p[:S, :B, :H]
    h_final = out[S - 1].astype(jnp.float32)   # final hidden = last output row
    c_final = c_p[:B, :H]
    return out, h_final, c_final


def init_encoder_params(key, input_dim, embedding_dim, hidden_dim, num_layers):
    keys = jax.random.split(key, 1 + 4 * num_layers)
    params = {
        "embedding": jax.random.normal(keys[0], (input_dim, embedding_dim),
                                       jnp.float32),
        "lstm": [],
    }
    bound = float(1.0 / (hidden_dim ** 0.5))
    for layer in range(num_layers):
        d_in = embedding_dim if layer == 0 else hidden_dim
        k = keys[1 + 4 * layer: 1 + 4 * (layer + 1)]
        w_ih = jax.random.uniform(k[0], (d_in, 4 * hidden_dim), jnp.float32,
                                  -bound, bound)
        w_hh = jax.random.uniform(k[1], (hidden_dim, 4 * hidden_dim),
                                  jnp.float32, -bound, bound)
        b_ih = jax.random.uniform(k[2], (1, 4 * hidden_dim), jnp.float32,
                                  -bound, bound)
        b_hh = jax.random.uniform(k[3], (1, 4 * hidden_dim), jnp.float32,
                                  -bound, bound)
        params["lstm"].append({"w_ih": w_ih, "w_hh": w_hh, "b": b_ih + b_hh})
    return params


def encoder_forward(params, x_ids, *, compute_dtype=jnp.float32):
    """x_ids: (seq_len, batch) int32 -> (hidden, cell), each
    (num_layers, batch, hidden_dim) f32.  compute_dtype=bf16 recommended on
    v6e/v7x for production (MXU throughput + halved DMA bytes)."""
    inp = params["embedding"][x_ids]   # (S, B, E) gather -- plain-JAX glue
    hs, cs = [], []
    for layer in params["lstm"]:
        inp, h, c = lstm_layer(inp, layer["w_ih"], layer["w_hh"], layer["b"],
                               compute_dtype=compute_dtype)
        hs.append(h)
        cs.append(c)
    return jnp.stack(hs, axis=0), jnp.stack(cs, axis=0)


def encoder_forward_ref(params, x_ids):
    """Pure-JAX reference (lax.scan) for correctness checking."""
    inp = params["embedding"][x_ids]
    hs, cs = [], []
    for layer in params["lstm"]:
        w_ih, w_hh, b = layer["w_ih"], layer["w_hh"], layer["b"]
        B = inp.shape[1]
        H = w_hh.shape[0]

        def step(carry, x_t, w_ih=w_ih, w_hh=w_hh, b=b, H=H):
            h, c = carry
            z = x_t @ w_ih + h @ w_hh + b
            i_g = _sigmoid(z[:, 0 * H:1 * H])
            f_g = _sigmoid(z[:, 1 * H:2 * H])
            g_g = jnp.tanh(z[:, 2 * H:3 * H])
            o_g = _sigmoid(z[:, 3 * H:4 * H])
            c_new = f_g * c + i_g * g_g
            h_new = o_g * jnp.tanh(c_new)
            return (h_new, c_new), h_new

        (h_f, c_f), out = lax.scan(
            step,
            (jnp.zeros((B, H), jnp.float32), jnp.zeros((B, H), jnp.float32)),
            inp)
        inp = out
        hs.append(h_f)
        cs.append(c_f)
    return jnp.stack(hs, axis=0), jnp.stack(cs, axis=0)


if __name__ == "__main__":
    # Small shapes consistent with the module's forward pass.
    input_dim = 16       # vocab size
    embedding_dim = 16
    hidden_dim = 32
    num_layers = 2
    seq_len, batch = 8, 2

    key = jax.random.PRNGKey(0)
    k_param, k_data = jax.random.split(key)
    params = init_encoder_params(k_param, input_dim, embedding_dim,
                                 hidden_dim, num_layers)
    x_ids = jax.random.randint(k_data, (seq_len, batch), 0, input_dim,
                               dtype=jnp.int32)

    # f32 path: exact check against the pure-JAX reference.
    fwd = jax.jit(encoder_forward)
    hidden, cell = fwd(params, x_ids)
    hidden, cell = jax.block_until_ready((hidden, cell))

    h_ref, c_ref = encoder_forward_ref(params, x_ids)
    assert hidden.shape == (num_layers, batch, hidden_dim)
    assert cell.shape == (num_layers, batch, hidden_dim)
    assert jnp.allclose(hidden, h_ref, atol=1e-5, rtol=1e-5)
    assert jnp.allclose(cell, c_ref, atol=1e-5, rtol=1e-5)

    # bf16 MXU-operand path (recommended on v6e/v7x): smoke test only.
    fwd_bf16 = jax.jit(functools.partial(encoder_forward,
                                         compute_dtype=jnp.bfloat16))
    h_bf, c_bf = jax.block_until_ready(fwd_bf16(params, x_ids))
    assert h_bf.shape == (num_layers, batch, hidden_dim)
    assert bool(jnp.all(jnp.isfinite(h_bf))) and bool(jnp.all(jnp.isfinite(c_bf)))

    print("KERNEL_OK")
</pallas_src>

<mosaic_0001>
module attributes {stable_mosaic.version = 11 : i64} {
  func.func @kernel(%arg0: i32, %arg1: i32, %arg2: memref<8x8x128xf32, #tpu.memory_space<vmem>>, %arg3: memref<128x512xf32, #tpu.memory_space<vmem>>, %arg4: memref<128x512xf32, #tpu.memory_space<vmem>>, %arg5: memref<1x512xf32, #tpu.memory_space<vmem>>, %arg6: memref<8x8x128xf32, #tpu.memory_space<vmem>>, %arg7: memref<8x128xf32, #tpu.memory_space<vmem>>, %arg8: memref<8x8x512xf32, #tpu.memory_space<vmem>>, %arg9: memref<8x128xf32, #tpu.memory_space<vmem>>, %arg10: memref<8x128xf32, #tpu.memory_space<vmem>>) attributes {dimension_semantics = [#tpu.dimension_semantics<parallel>, #tpu.dimension_semantics<arbitrary>], iteration_bounds = array<i64: 1, 1>, scalar_prefetch = 0 : i64, scratch_operands = 3 : i64, tpu.core_type = #tpu.core_type<tc>, window_params = [{transform_indices = @transform_0, window_bounds = array<i64: 8, 8, 128>}, {pipeline_mode = #tpu.pipeline_mode<synchronous>, transform_indices = @transform_1, window_bounds = array<i64: 128, 512>}, {pipeline_mode = #tpu.pipeline_mode<synchronous>, transform_indices = @transform_2, window_bounds = array<i64: 128, 512>}, {pipeline_mode = #tpu.pipeline_mode<synchronous>, transform_indices = @transform_3, window_bounds = array<i64: 1, 512>}, {transform_indices = @transform_4, window_bounds = array<i64: 8, 8, 128>}, {transform_indices = @transform_5, window_bounds = array<i64: 8, 128>}]} {
    %c0_i32 = arith.constant 0 : i32
    %0 = arith.cmpi eq, %arg1, %c0_i32 : i32
    %1 = arith.extui %0 : i1 to i32
    %c0_i32_0 = arith.constant 0 : i32
    %2 = arith.cmpi ne, %1, %c0_i32_0 : i32
    scf.if %2 {
      %cst_135 = arith.constant 0.000000e+00 : f32
      %339 = vector.broadcast %cst_135 : f32 to vector<8x128xf32>
      %c0_136 = arith.constant 0 : index
      %c0_137 = arith.constant 0 : index
      %340 = vector.load %arg9[%c0_136, %c0_137] : memref<8x128xf32, #tpu.memory_space<vmem>>, vector<8x128xf32>
      tpu.vector_store %arg9[%c0_136, %c0_137], %339 {strides = array<i32>} : memref<8x128xf32, #tpu.memory_space<vmem>>, vector<8x128xf32>,
      %cst_138 = arith.constant 0.000000e+00 : f32
      %341 = vector.broadcast %cst_138 : f32 to vector<8x128xf32>
      %c0_139 = arith.constant 0 : index
      %c0_140 = arith.constant 0 : index
      %342 = vector.load %arg10[%c0_139, %c0_140] : memref<8x128xf32, #tpu.memory_space<vmem>>, vector<8x128xf32>
      tpu.vector_store %arg10[%c0_139, %c0_140], %341 {strides = array<i32>} : memref<8x128xf32, #tpu.memory_space<vmem>>, vector<8x128xf32>,
    } else {
    }
    %c0 = arith.constant 0 : index
    %c0_1 = arith.constant 0 : index
    %c0_2 = arith.constant 0 : index
    %3 = vector.load %arg2[%c0, %c0_1, %c0_2] : memref<8x8x128xf32, #tpu.memory_space<vmem>>, vector<8x8x128xf32>
    %c0_3 = arith.constant 0 : index
    %c0_4 = arith.constant 0 : index
    %4 = vector.load %arg3[%c0_3, %c0_4] : memref<128x512xf32, #tpu.memory_space<vmem>>, vector<128x512xf32>
    "tpu.trace_start"() <{level = 10 : i32, message = "tbd,dg->tbg"}> : () -> ()
    %cst = arith.constant dense<0.000000e+00> : vector<8x8x512xf32>
    %5 = tpu.matmul %3, %4, %cst {dimension_numbers = #tpu.dot_dimension_numbers<[2], [0], [0, 1], [1], [0, 0, 0, 1, 1, 1], [], []>} : vector<8x8x128xf32>, vector<128x512xf32>, vector<8x8x512xf32> -> vector<8x8x512xf32>
    "tpu.trace_stop"() : () -> ()
    %c0_5 = arith.constant 0 : index
    %c0_6 = arith.constant 0 : index
    %6 = vector.load %arg5[%c0_5, %c0_6] : memref<1x512xf32, #tpu.memory_space<vmem>>, vector<1x512xf32>
    %7 = vector.shape_cast %6 : vector<1x512xf32> to vector<1x1x512xf32>
    %8 = vector.broadcast %7 : vector<1x1x512xf32> to vector<8x8x512xf32>
    %9 = arith.addf %5, %8 : vector<8x8x512xf32>
    %c0_7 = arith.constant 0 : index
    %c0_8 = arith.constant 0 : index
    %c0_9 = arith.constant 0 : index
    %10 = vector.load %arg8[%c0_7, %c0_8, %c0_9] : memref<8x8x512xf32, #tpu.memory_space<vmem>>, vector<8x8x512xf32>
    tpu.vector_store %arg8[%c0_7, %c0_8, %c0_9], %9 {strides = array<i32>} : memref<8x8x512xf32, #tpu.memory_space<vmem>>, vector<8x8x512xf32>,
    %c0_10 = arith.constant 0 : index
    %c0_11 = arith.constant 0 : index
    %11 = vector.load %arg4[%c0_10, %c0_11] : memref<128x512xf32, #tpu.memory_space<vmem>>, vector<128x512xf32>
    %c0_12 = arith.constant 0 : index
    %c0_13 = arith.constant 0 : index
    %12 = vector.load %arg9[%c0_12, %c0_13] : memref<8x128xf32, #tpu.memory_space<vmem>>, vector<8x128xf32>
    %c0_14 = arith.constant 0 : index
    %c0_15 = arith.constant 0 : index
    %13 = vector.load %arg10[%c0_14, %c0_15] : memref<8x128xf32, #tpu.memory_space<vmem>>, vector<8x128xf32>
    %c0_i32_16 = arith.constant 0 : i32
    %14 = arith.index_cast %c0_i32_16 : i32 to index
    %c0_17 = arith.constant 0 : index
    %c0_18 = arith.constant 0 : index
    %15 = vector.load %arg8[%14, %c0_17, %c0_18] : memref<8x8x512xf32, #tpu.memory_space<vmem>>, vector<1x8x512xf32>
    %16 = vector.shape_cast %15 : vector<1x8x512xf32> to vector<8x512xf32>
    %cst_19 = arith.constant dense<0.000000e+00> : vector<8x512xf32>
    %17 = tpu.matmul %12, %11, %cst_19 {dimension_numbers = #tpu.dot_dimension_numbers<[1], [0], [0], [1], [0, 0, 1, 1], [], []>} : vector<8x128xf32>, vector<128x512xf32>, vector<8x512xf32> -> vector<8x512xf32>
    %18 = arith.addf %16, %17 : vector<8x512xf32>
    %19 = vector.extract_strided_slice %18 {offsets = [0, 0], sizes = [8, 128], strides = [1, 1]} : vector<8x512xf32> to vector<8x128xf32>
    %cst_20 = arith.constant 5.000000e-01 : f32
    %20 = vector.broadcast %cst_20 : f32 to vector<8x128xf32>
    %21 = arith.mulf %20, %19 : vector<8x128xf32>
    %22 = math.tanh %21 : vector<8x128xf32>
    %cst_21 = arith.constant 1.000000e+00 : f32
    %23 = vector.broadcast %cst_21 : f32 to vector<8x128xf32>
    %24 = arith.addf %22, %23 : vector<8x128xf32>
    %cst_22 = arith.constant 5.000000e-01 : f32
    %25 = vector.broadcast %cst_22 : f32 to vector<8x128xf32>
    %26 = arith.mulf %25, %24 : vector<8x128xf32>
    %27 = vector.extract_strided_slice %18 {offsets = [0, 128], sizes = [8, 128], strides = [1, 1]} : vector<8x512xf32> to vector<8x128xf32>
    %cst_23 = arith.constant 5.000000e-01 : f32
    %28 = vector.broadcast %cst_23 : f32 to vector<8x128xf32>
    %29 = arith.mulf %28, %27 : vector<8x128xf32>
    %30 = math.tanh %29 : vector<8x128xf32>
    %cst_24 = arith.constant 1.000000e+00 : f32
    %31 = vector.broadcast %cst_24 : f32 to vector<8x128xf32>
    %32 = arith.addf %30, %31 : vector<8x128xf32>
    %cst_25 = arith.constant 5.000000e-01 : f32
    %33 = vector.broadcast %cst_25 : f32 to vector<8x128xf32>
    %34 = arith.mulf %33, %32 : vector<8x128xf32>
    %35 = vector.extract_strided_slice %18 {offsets = [0, 256], sizes = [8, 128], strides = [1, 1]} : vector<8x512xf32> to vector<8x128xf32>
    %36 = math.tanh %35 : vector<8x128xf32>
    %37 = vector.extract_strided_slice %18 {offsets = [0, 384], sizes = [8, 128], strides = [1, 1]} : vector<8x512xf32> to vector<8x128xf32>
    %cst_26 = arith.constant 5.000000e-01 : f32
    %38 = vector.broadcast %cst_26 : f32 to vector<8x128xf32>
    %39 = arith.mulf %38, %37 : vector<8x128xf32>
    %40 = math.tanh %39 : vector<8x128xf32>
    %cst_27 = arith.constant 1.000000e+00 : f32
    %41 = vector.broadcast %cst_27 : f32 to vector<8x128xf32>
    %42 = arith.addf %40, %41 : vector<8x128xf32>
    %cst_28 = arith.constant 5.000000e-01 : f32
    %43 = vector.broadcast %cst_28 : f32 to vector<8x128xf32>
    %44 = arith.mulf %43, %42 : vector<8x128xf32>
    %45 = arith.mulf %34, %13 : vector<8x128xf32>
    %46 = arith.mulf %26, %36 : vector<8x128xf32>
    %47 = arith.addf %45, %46 : vector<8x128xf32>
    %48 = math.tanh %47 : vector<8x128xf32>
    %49 = arith.mulf %44, %48 : vector<8x128xf32>
    %50 = arith.index_cast %c0_i32_16 : i32 to index
    %c0_29 = arith.constant 0 : index
    %c0_30 = arith.constant 0 : index
    %51 = vector.load %arg6[%50, %c0_29, %c0_30] : memref<8x8x128xf32, #tpu.memory_space<vmem>>, vector<1x8x128xf32>
    %52 = vector.shape_cast %51 : vector<1x8x128xf32> to vector<8x128xf32>
    %53 = vector.shape_cast %49 : vector<8x128xf32> to vector<1x8x128xf32>
    tpu.vector_store %arg6[%50, %c0_29, %c0_30], %53 {strides = array<i32>} : memref<8x8x128xf32, #tpu.memory_space<vmem>>, vector<1x8x128xf32>,
    %c1_i32 = arith.constant 1 : i32
    %54 = arith.index_cast %c1_i32 : i32 to index
    %c0_31 = arith.constant 0 : index
    %c0_32 = arith.constant 0 : index
    %55 = vector.load %arg8[%54, %c0_31, %c0_32] : memref<8x8x512xf32, #tpu.memory_space<vmem>>, vector<1x8x512xf32>
    %56 = vector.shape_cast %55 : vector<1x8x512xf32> to vector<8x512xf32>
    %cst_33 = arith.constant dense<0.000000e+00> : vector<8x512xf32>
    %57 = tpu.matmul %49, %11, %cst_33 {dimension_numbers = #tpu.dot_dimension_numbers<[1], [0], [0], [1], [0, 0, 1, 1], [], []>} : vector<8x128xf32>, vector<128x512xf32>, vector<8x512xf32> -> vector<8x512xf32>
    %58 = arith.addf %56, %57 : vector<8x512xf32>
    %59 = vector.extract_strided_slice %58 {offsets = [0, 0], sizes = [8, 128], strides = [1, 1]} : vector<8x512xf32> to vector<8x128xf32>
    %cst_34 = arith.constant 5.000000e-01 : f32
    %60 = vector.broadcast %cst_34 : f32 to vector<8x128xf32>
    %61 = arith.mulf %60, %59 : vector<8x128xf32>
    %62 = math.tanh %61 : vector<8x128xf32>
    %cst_35 = arith.constant 1.000000e+00 : f32
    %63 = vector.broadcast %cst_35 : f32 to vector<8x128xf32>
    %64 = arith.addf %62, %63 : vector<8x128xf32>
    %cst_36 = arith.constant 5.000000e-01 : f32
    %65 = vector.broadcast %cst_36 : f32 to vector<8x128xf32>
    %66 = arith.mulf %65, %64 : vector<8x128xf32>
    %67 = vector.extract_strided_slice %58 {offsets = [0, 128], sizes = [8, 128], strides = [1, 1]} : vector<8x512xf32> to vector<8x128xf32>
    %cst_37 = arith.constant 5.000000e-01 : f32
    %68 = vector.broadcast %cst_37 : f32 to vector<8x128xf32>
    %69 = arith.mulf %68, %67 : vector<8x128xf32>
    %70 = math.tanh %69 : vector<8x128xf32>
    %cst_38 = arith.constant 1.000000e+00 : f32
    %71 = vector.broadcast %cst_38 : f32 to vector<8x128xf32>
    %72 = arith.addf %70, %71 : vector<8x128xf32>
    %cst_39 = arith.constant 5.000000e-01 : f32
    %73 = vector.broadcast %cst_39 : f32 to vector<8x128xf32>
    %74 = arith.mulf %73, %72 : vector<8x128xf32>
    %75 = vector.extract_strided_slice %58 {offsets = [0, 256], sizes = [8, 128], strides = [1, 1]} : vector<8x512xf32> to vector<8x128xf32>
    %76 = math.tanh %75 : vector<8x128xf32>
    %77 = vector.extract_strided_slice %58 {offsets = [0, 384], sizes = [8, 128], strides = [1, 1]} : vector<8x512xf32> to vector<8x128xf32>
    %cst_40 = arith.constant 5.000000e-01 : f32
    %78 = vector.broadcast %cst_40 : f32 to vector<8x128xf32>
    %79 = arith.mulf %78, %77 : vector<8x128xf32>
    %80 = math.tanh %79 : vector<8x128xf32>
    %cst_41 = arith.constant 1.000000e+00 : f32
    %81 = vector.broadcast %cst_41 : f32 to vector<8x128xf32>
    %82 = arith.addf %80, %81 : vector<8x128xf32>
    %cst_42 = arith.constant 5.000000e-01 : f32
    %83 = vector.broadcast %cst_42 : f32 to vector<8x128xf32>
    %84 = arith.mulf %83, %82 : vector<8x128xf32>
    %85 = arith.mulf %74, %47 : vector<8x128xf32>
    %86 = arith.mulf %66, %76 : vector<8x128xf32>
    %87 = arith.addf %85, %86 : vector<8x128xf32>
    %88 = math.tanh %87 : vector<8x128xf32>
    %89 = arith.mulf %84, %88 : vector<8x128xf32>
    %90 = arith.index_cast %c1_i32 : i32 to index
    %c0_43 = arith.constant 0 : index
    %c0_44 = arith.constant 0 : index
    %91 = vector.load %arg6[%90, %c0_43, %c0_44] : memref<8x8x128xf32, #tpu.memory_space<vmem>>, vector<1x8x128xf32>
    %92 = vector.shape_cast %91 : vector<1x8x128xf32> to vector<8x128xf32>
    %93 = vector.shape_cast %89 : vector<8x128xf32> to vector<1x8x128xf32>
    tpu.vector_store %arg6[%90, %c0_43, %c0_44], %93 {strides = array<i32>} : memref<8x8x128xf32, #tpu.memory_space<vmem>>, vector<1x8x128xf32>,
    %c2_i32 = arith.constant 2 : i32
    %94 = arith.index_cast %c2_i32 : i32 to index
    %c0_45 = arith.constant 0 : index
    %c0_46 = arith.constant 0 : index
    %95 = vector.load %arg8[%94, %c0_45, %c0_46] : memref<8x8x512xf32, #tpu.memory_space<vmem>>, vector<1x8x512xf32>
    %96 = vector.shape_cast %95 : vector<1x8x512xf32> to vector<8x512xf32>
    %cst_47 = arith.constant dense<0.000000e+00> : vector<8x512xf32>
    %97 = tpu.matmul %89, %11, %cst_47 {dimension_numbers = #tpu.dot_dimension_numbers<[1], [0], [0], [1], [0, 0, 1, 1], [], []>} : vector<8x128xf32>, vector<128x512xf32>, vector<8x512xf32> -> vector<8x512xf32>
    %98 = arith.addf %96, %97 : vector<8x512xf32>
    %99 = vector.extract_strided_slice %98 {offsets = [0, 0], sizes = [8, 128], strides = [1, 1]} : vector<8x512xf32> to vector<8x128xf32>
    %cst_48 = arith.constant 5.000000e-01 : f32
    %100 = vector.broadcast %cst_48 : f32 to vector<8x128xf32>
    %101 = arith.mulf %100, %99 : vector<8x128xf32>
    %102 = math.tanh %101 : vector<8x128xf32>
    %cst_49 = arith.constant 1.000000e+00 : f32
    %103 = vector.broadcast %cst_49 : f32 to vector<8x128xf32>
    %104 = arith.addf %102, %103 : vector<8x128xf32>
    %cst_50 = arith.constant 5.000000e-01 : f32
    %105 = vector.broadcast %cst_50 : f32 to vector<8x128xf32>
    %106 = arith.mulf %105, %104 : vector<8x128xf32>
    %107 = vector.extract_strided_slice %98 {offsets = [0, 128], sizes = [8, 128], strides = [1, 1]} : vector<8x512xf32> to vector<8x128xf32>
    %cst_51 = arith.constant 5.000000e-01 : f32
    %108 = vector.broadcast %cst_51 : f32 to vector<8x128xf32>
    %109 = arith.mulf %108, %107 : vector<8x128xf32>
    %110 = math.tanh %109 : vector<8x128xf32>
    %cst_52 = arith.constant 1.000000e+00 : f32
    %111 = vector.broadcast %cst_52 : f32 to vector<8x128xf32>
    %112 = arith.addf %110, %111 : vector<8x128xf32>
    %cst_53 = arith.constant 5.000000e-01 : f32
    %113 = vector.broadcast %cst_53 : f32 to vector<8x128xf32>
    %114 = arith.mulf %113, %112 : vector<8x128xf32>
    %115 = vector.extract_strided_slice %98 {offsets = [0, 256], sizes = [8, 128], strides = [1, 1]} : vector<8x512xf32> to vector<8x128xf32>
    %116 = math.tanh %115 : vector<8x128xf32>
    %117 = vector.extract_strided_slice %98 {offsets = [0, 384], sizes = [8, 128], strides = [1, 1]} : vector<8x512xf32> to vector<8x128xf32>
    %cst_54 = arith.constant 5.000000e-01 : f32
    %118 = vector.broadcast %cst_54 : f32 to vector<8x128xf32>
    %119 = arith.mulf %118, %117 : vector<8x128xf32>
    %120 = math.tanh %119 : vector<8x128xf32>
    %cst_55 = arith.constant 1.000000e+00 : f32
    %121 = vector.broadcast %cst_55 : f32 to vector<8x128xf32>
    %122 = arith.addf %120, %121 : vector<8x128xf32>
    %cst_56 = arith.constant 5.000000e-01 : f32
    %123 = vector.broadcast %cst_56 : f32 to vector<8x128xf32>
    %124 = arith.mulf %123, %122 : vector<8x128xf32>
    %125 = arith.mulf %114, %87 : vector<8x128xf32>
    %126 = arith.mulf %106, %116 : vector<8x128xf32>
    %127 = arith.addf %125, %126 : vector<8x128xf32>
    %128 = math.tanh %127 : vector<8x128xf32>
    %129 = arith.mulf %124, %128 : vector<8x128xf32>
    %130 = arith.index_cast %c2_i32 : i32 to index
    %c0_57 = arith.constant 0 : index
    %c0_58 = arith.constant 0 : index
    %131 = vector.load %arg6[%130, %c0_57, %c0_58] : memref<8x8x128xf32, #tpu.memory_space<vmem>>, vector<1x8x128xf32>
    %132 = vector.shape_cast %131 : vector<1x8x128xf32> to vector<8x128xf32>
    %133 = vector.shape_cast %129 : vector<8x128xf32> to vector<1x8x128xf32>
    tpu.vector_store %arg6[%130, %c0_57, %c0_58], %133 {strides = array<i32>} : memref<8x8x128xf32, #tpu.memory_space<vmem>>, vector<1x8x128xf32>,
    %c3_i32 = arith.constant 3 : i32
    %134 = arith.index_cast %c3_i32 : i32 to index
    %c0_59 = arith.constant 0 : index
    %c0_60 = arith.constant 0 : index
    %135 = vector.load %arg8[%134, %c0_59, %c0_60] : memref<8x8x512xf32, #tpu.memory_space<vmem>>, vector<1x8x512xf32>
    %136 = vector.shape_cast %135 : vector<1x8x512xf32> to vector<8x512xf32>
    %cst_61 = arith.constant dense<0.000000e+00> : vector<8x512xf32>
    %137 = tpu.matmul %129, %11, %cst_61 {dimension_numbers = #tpu.dot_dimension_numbers<[1], [0], [0], [1], [0, 0, 1, 1], [], []>} : vector<8x128xf32>, vector<128x512xf32>, vector<8x512xf32> -> vector<8x512xf32>
    %138 = arith.addf %136, %137 : vector<8x512xf32>
    %139 = vector.extract_strided_slice %138 {offsets = [0, 0], sizes = [8, 128], strides = [1, 1]} : vector<8x512xf32> to vector<8x128xf32>
    %cst_62 = arith.constant 5.000000e-01 : f32
    %140 = vector.broadcast %cst_62 : f32 to vector<8x128xf32>
    %141 = arith.mulf %140, %139 : vector<8x128xf32>
    %142 = math.tanh %141 : vector<8x128xf32>
    %cst_63 = arith.constant 1.000000e+00 : f32
    %143 = vector.broadcast %cst_63 : f32 to vector<8x128xf32>
    %144 = arith.addf %142, %143 : vector<8x128xf32>
    %cst_64 = arith.constant 5.000000e-01 : f32
    %145 = vector.broadcast %cst_64 : f32 to vector<8x128xf32>
    %146 = arith.mulf %145, %144 : vector<8x128xf32>
    %147 = vector.extract_strided_slice %138 {offsets = [0, 128], sizes = [8, 128], strides = [1, 1]} : vector<8x512xf32> to vector<8x128xf32>
    %cst_65 = arith.constant 5.000000e-01 : f32
    %148 = vector.broadcast %cst_65 : f32 to vector<8x128xf32>
    %149 = arith.mulf %148, %147 : vector<8x128xf32>
    %150 = math.tanh %149 : vector<8x128xf32>
    %cst_66 = arith.constant 1.000000e+00 : f32
    %151 = vector.broadcast %cst_66 : f32 to vector<8x128xf32>
    %152 = arith.addf %150, %151 : vector<8x128xf32>
    %cst_67 = arith.constant 5.000000e-01 : f32
    %153 = vector.broadcast %cst_67 : f32 to vector<8x128xf32>
    %154 = arith.mulf %153, %152 : vector<8x128xf32>
    %155 = vector.extract_strided_slice %138 {offsets = [0, 256], sizes = [8, 128], strides = [1, 1]} : vector<8x512xf32> to vector<8x128xf32>
    %156 = math.tanh %155 : vector<8x128xf32>
    %157 = vector.extract_strided_slice %138 {offsets = [0, 384], sizes = [8, 128], strides = [1, 1]} : vector<8x512xf32> to vector<8x128xf32>
    %cst_68 = arith.constant 5.000000e-01 : f32
    %158 = vector.broadcast %cst_68 : f32 to vector<8x128xf32>
    %159 = arith.mulf %158, %157 : vector<8x128xf32>
    %160 = math.tanh %159 : vector<8x128xf32>
    %cst_69 = arith.constant 1.000000e+00 : f32
    %161 = vector.broadcast %cst_69 : f32 to vector<8x128xf32>
    %162 = arith.addf %160, %161 : vector<8x128xf32>
    %cst_70 = arith.constant 5.000000e-01 : f32
    %163 = vector.broadcast %cst_70 : f32 to vector<8x128xf32>
    %164 = arith.mulf %163, %162 : vector<8x128xf32>
    %165 = arith.mulf %154, %127 : vector<8x128xf32>
    %166 = arith.mulf %146, %156 : vector<8x128xf32>
    %167 = arith.addf %165, %166 : vector<8x128xf32>
    %168 = math.tanh %167 : vector<8x128xf32>
    %169 = arith.mulf %164, %168 : vector<8x128xf32>
    %170 = arith.index_cast %c3_i32 : i32 to index
    %c0_71 = arith.constant 0 : index
    %c0_72 = arith.constant 0 : index
    %171 = vector.load %arg6[%170, %c0_71, %c0_72] : memref<8x8x128xf32, #tpu.memory_space<vmem>>, vector<1x8x128xf32>
    %172 = vector.shape_cast %171 : vector<1x8x128xf32> to vector<8x128xf32>
    %173 = vector.shape_cast %169 : vector<8x128xf32> to vector<1x8x128xf32>
    tpu.vector_store %arg6[%170, %c0_71, %c0_72], %173 {strides = array<i32>} : memref<8x8x128xf32, #tpu.memory_space<vmem>>, vector<1x8x128xf32>,
    %c4_i32 = arith.constant 4 : i32
    %174 = arith.index_cast %c4_i32 : i32 to index
    %c0_73 = arith.constant 0 : index
    %c0_74 = arith.constant 0 : index
    %175 = vector.load %arg8[%174, %c0_73, %c0_74] : memref<8x8x512xf32, #tpu.memory_space<vmem>>, vector<1x8x512xf32>
    %176 = vector.shape_cast %175 : vector<1x8x512xf32> to vector<8x512xf32>
    %cst_75 = arith.constant dense<0.000000e+00> : vector<8x512xf32>
    %177 = tpu.matmul %169, %11, %cst_75 {dimension_numbers = #tpu.dot_dimension_numbers<[1], [0], [0], [1], [0, 0, 1, 1], [], []>} : vector<8x128xf32>, vector<128x512xf32>, vector<8x512xf32> -> vector<8x512xf32>
    %178 = arith.addf %176, %177 : vector<8x512xf32>
    %179 = vector.extract_strided_slice %178 {offsets = [0, 0], sizes = [8, 128], strides = [1, 1]} : vector<8x512xf32> to vector<8x128xf32>
    %cst_76 = arith.constant 5.000000e-01 : f32
    %180 = vector.broadcast %cst_76 : f32 to vector<8x128xf32>
    %181 = arith.mulf %180, %179 : vector<8x128xf32>
    %182 = math.tanh %181 : vector<8x128xf32>
    %cst_77 = arith.constant 1.000000e+00 : f32
    %183 = vector.broadcast %cst_77 : f32 to vector<8x128xf32>
    %184 = arith.addf %182, %183 : vector<8x128xf32>
    %cst_78 = arith.constant 5.000000e-01 : f32
    %185 = vector.broadcast %cst_78 : f32 to vector<8x128xf32>
    %186 = arith.mulf %185, %184 : vector<8x128xf32>
    %187 = vector.extract_strided_slice %178 {offsets = [0, 128], sizes = [8, 128], strides = [1, 1]} : vector<8x512xf32> to vector<8x128xf32>
    %cst_79 = arith.constant 5.000000e-01 : f32
    %188 = vector.broadcast %cst_79 : f32 to vector<8x128xf32>
    %189 = arith.mulf %188, %187 : vector<8x128xf32>
    %190 = math.tanh %189 : vector<8x128xf32>
    %cst_80 = arith.constant 1.000000e+00 : f32
    %191 = vector.broadcast %cst_80 : f32 to vector<8x128xf32>
    %192 = arith.addf %190, %191 : vector<8x128xf32>
    %cst_81 = arith.constant 5.000000e-01 : f32
    %193 = vector.broadcast %cst_81 : f32 to vector<8x128xf32>
    %194 = arith.mulf %193, %192 : vector<8x128xf32>
    %195 = vector.extract_strided_slice %178 {offsets = [0, 256], sizes = [8, 128], strides = [1, 1]} : vector<8x512xf32> to vector<8x128xf32>
    %196 = math.tanh %195 : vector<8x128xf32>
    %197 = vector.extract_strided_slice %178 {offsets = [0, 384], sizes = [8, 128], strides = [1, 1]} : vector<8x512xf32> to vector<8x128xf32>
    %cst_82 = arith.constant 5.000000e-01 : f32
    %198 = vector.broadcast %cst_82 : f32 to vector<8x128xf32>
    %199 = arith.mulf %198, %197 : vector<8x128xf32>
    %200 = math.tanh %199 : vector<8x128xf32>
    %cst_83 = arith.constant 1.000000e+00 : f32
    %201 = vector.broadcast %cst_83 : f32 to vector<8x128xf32>
    %202 = arith.addf %200, %201 : vector<8x128xf32>
    %cst_84 = arith.constant 5.000000e-01 : f32
    %203 = vector.broadcast %cst_84 : f32 to vector<8x128xf32>
    %204 = arith.mulf %203, %202 : vector<8x128xf32>
    %205 = arith.mulf %194, %167 : vector<8x128xf32>
    %206 = arith.mulf %186, %196 : vector<8x128xf32>
    %207 = arith.addf %205, %206 : vector<8x128xf32>
    %208 = math.tanh %207 : vector<8x128xf32>
    %209 = arith.mulf %204, %208 : vector<8x128xf32>
    %210 = arith.index_cast %c4_i32 : i32 to index
    %c0_85 = arith.constant 0 : index
    %c0_86 = arith.constant 0 : index
    %211 = vector.load %arg6[%210, %c0_85, %c0_86] : memref<8x8x128xf32, #tpu.memory_space<vmem>>, vector<1x8x128xf32>
    %212 = vector.shape_cast %211 : vector<1x8x128xf32> to vector<8x128xf32>
    %213 = vector.shape_cast %209 : vector<8x128xf32> to vector<1x8x128xf32>
    tpu.vector_store %arg6[%210, %c0_85, %c0_86], %213 {strides = array<i32>} : memref<8x8x128xf32, #tpu.memory_space<vmem>>, vector<1x8x128xf32>,
    %c5_i32 = arith.constant 5 : i32
    %214 = arith.index_cast %c5_i32 : i32 to index
    %c0_87 = arith.constant 0 : index
    %c0_88 = arith.constant 0 : index
    %215 = vector.load %arg8[%214, %c0_87, %c0_88] : memref<8x8x512xf32, #tpu.memory_space<vmem>>, vector<1x8x512xf32>
    %216 = vector.shape_cast %215 : vector<1x8x512xf32> to vector<8x512xf32>
    %cst_89 = arith.constant dense<0.000000e+00> : vector<8x512xf32>
    %217 = tpu.matmul %209, %11, %cst_89 {dimension_numbers = #tpu.dot_dimension_numbers<[1], [0], [0], [1], [0, 0, 1, 1], [], []>} : vector<8x128xf32>, vector<128x512xf32>, vector<8x512xf32> -> vector<8x512xf32>
    %218 = arith.addf %216, %217 : vector<8x512xf32>
    %219 = vector.extract_strided_slice %218 {offsets = [0, 0], sizes = [8, 128], strides = [1, 1]} : vector<8x512xf32> to vector<8x128xf32>
    %cst_90 = arith.constant 5.000000e-01 : f32
    %220 = vector.broadcast %cst_90 : f32 to vector<8x128xf32>
    %221 = arith.mulf %220, %219 : vector<8x128xf32>
    %222 = math.tanh %221 : vector<8x128xf32>
    %cst_91 = arith.constant 1.000000e+00 : f32
    %223 = vector.broadcast %cst_91 : f32 to vector<8x128xf32>
    %224 = arith.addf %222, %223 : vector<8x128xf32>
    %cst_92 = arith.constant 5.000000e-01 : f32
    %225 = vector.broadcast %cst_92 : f32 to vector<8x128xf32>
    %226 = arith.mulf %225, %224 : vector<8x128xf32>
    %227 = vector.extract_strided_slice %218 {offsets = [0, 128], sizes = [8, 128], strides = [1, 1]} : vector<8x512xf32> to vector<8x128xf32>
    %cst_93 = arith.constant 5.000000e-01 : f32
    %228 = vector.broadcast %cst_93 : f32 to vector<8x128xf32>
    %229 = arith.mulf %228, %227 : vector<8x128xf32>
    %230 = math.tanh %229 : vector<8x128xf32>
    %cst_94 = arith.constant 1.000000e+00 : f32
    %231 = vector.broadcast %cst_94 : f32 to vector<8x128xf32>
    %232 = arith.addf %230, %231 : vector<8x128xf32>
    %cst_95 = arith.constant 5.000000e-01 : f32
    %233 = vector.broadcast %cst_95 : f32 to vector<8x128xf32>
    %234 = arith.mulf %233, %232 : vector<8x128xf32>
    %235 = vector.extract_strided_slice %218 {offsets = [0, 256], sizes = [8, 128], strides = [1, 1]} : vector<8x512xf32> to vector<8x128xf32>
    %236 = math.tanh %235 : vector<8x128xf32>
    %237 = vector.extract_strided_slice %218 {offsets = [0, 384], sizes = [8, 128], strides = [1, 1]} : vector<8x512xf32> to vector<8x128xf32>
    %cst_96 = arith.constant 5.000000e-01 : f32
    %238 = vector.broadcast %cst_96 : f32 to vector<8x128xf32>
    %239 = arith.mulf %238, %237 : vector<8x128xf32>
    %240 = math.tanh %239 : vector<8x128xf32>
    %cst_97 = arith.constant 1.000000e+00 : f32
    %241 = vector.broadcast %cst_97 : f32 to vector<8x128xf32>
    %242 = arith.addf %240, %241 : vector<8x128xf32>
    %cst_98 = arith.constant 5.000000e-01 : f32
    %243 = vector.broadcast %cst_98 : f32 to vector<8x128xf32>
    %244 = arith.mulf %243, %242 : vector<8x128xf32>
    %245 = arith.mulf %234, %207 : vector<8x128xf32>
    %246 = arith.mulf %226, %236 : vector<8x128xf32>
    %247 = arith.addf %245, %246 : vector<8x128xf32>
    %248 = math.tanh %247 : vector<8x128xf32>
    %249 = arith.mulf %244, %248 : vector<8x128xf32>
    %250 = arith.index_cast %c5_i32 : i32 to index
    %c0_99 = arith.constant 0 : index
    %c0_100 = arith.constant 0 : index
    %251 = vector.load %arg6[%250, %c0_99, %c0_100] : memref<8x8x128xf32, #tpu.memory_space<vmem>>, vector<1x8x128xf32>
    %252 = vector.shape_cast %251 : vector<1x8x128xf32> to vector<8x128xf32>
    %253 = vector.shape_cast %249 : vector<8x128xf32> to vector<1x8x128xf32>
    tpu.vector_store %arg6[%250, %c0_99, %c0_100], %253 {strides = array<i32>} : memref<8x8x128xf32, #tpu.memory_space<vmem>>, vector<1x8x128xf32>,
    %c6_i32 = arith.constant 6 : i32
    %254 = arith.index_cast %c6_i32 : i32 to index
    %c0_101 = arith.constant 0 : index
    %c0_102 = arith.constant 0 : index
    %255 = vector.load %arg8[%254, %c0_101, %c0_102] : memref<8x8x512xf32, #tpu.memory_space<vmem>>, vector<1x8x512xf32>
    %256 = vector.shape_cast %255 : vector<1x8x512xf32> to vector<8x512xf32>
    %cst_103 = arith.constant dense<0.000000e+00> : vector<8x512xf32>
    %257 = tpu.matmul %249, %11, %cst_103 {dimension_numbers = #tpu.dot_dimension_numbers<[1], [0], [0], [1], [0, 0, 1, 1], [], []>} : vector<8x128xf32>, vector<128x512xf32>, vector<8x512xf32> -> vector<8x512xf32>
    %258 = arith.addf %256, %257 : vector<8x512xf32>
    %259 = vector.extract_strided_slice %258 {offsets = [0, 0], sizes = [8, 128], strides = [1, 1]} : vector<8x512xf32> to vector<8x128xf32>
    %cst_104 = arith.constant 5.000000e-01 : f32
    %260 = vector.broadcast %cst_104 : f32 to vector<8x128xf32>
    %261 = arith.mulf %260, %259 : vector<8x128xf32>
    %262 = math.tanh %261 : vector<8x128xf32>
    %cst_105 = arith.constant 1.000000e+00 : f32
    %263 = vector.broadcast %cst_105 : f32 to vector<8x128xf32>
    %264 = arith.addf %262, %263 : vector<8x128xf32>
    %cst_106 = arith.constant 5.000000e-01 : f32
    %265 = vector.broadcast %cst_106 : f32 to vector<8x128xf32>
    %266 = arith.mulf %265, %264 : vector<8x128xf32>
    %267 = vector.extract_strided_slice %258 {offsets = [0, 128], sizes = [8, 128], strides = [1, 1]} : vector<8x512xf32> to vector<8x128xf32>
    %cst_107 = arith.constant 5.000000e-01 : f32
    %268 = vector.broadcast %cst_107 : f32 to vector<8x128xf32>
    %269 = arith.mulf %268, %267 : vector<8x128xf32>
    %270 = math.tanh %269 : vector<8x128xf32>
    %cst_108 = arith.constant 1.000000e+00 : f32
    %271 = vector.broadcast %cst_108 : f32 to vector<8x128xf32>
    %272 = arith.addf %270, %271 : vector<8x128xf32>
    %cst_109 = arith.constant 5.000000e-01 : f32
    %273 = vector.broadcast %cst_109 : f32 to vector<8x128xf32>
    %274 = arith.mulf %273, %272 : vector<8x128xf32>
    %275 = vector.extract_strided_slice %258 {offsets = [0, 256], sizes = [8, 128], strides = [1, 1]} : vector<8x512xf32> to vector<8x128xf32>
    %276 = math.tanh %275 : vector<8x128xf32>
    %277 = vector.extract_strided_slice %258 {offsets = [0, 384], sizes = [8, 128], strides = [1, 1]} : vector<8x512xf32> to vector<8x128xf32>
    %cst_110 = arith.constant 5.000000e-01 : f32
    %278 = vector.broadcast %cst_110 : f32 to vector<8x128xf32>
    %279 = arith.mulf %278, %277 : vector<8x128xf32>
    %280 = math.tanh %279 : vector<8x128xf32>
    %cst_111 = arith.constant 1.000000e+00 : f32
    %281 = vector.broadcast %cst_111 : f32 to vector<8x128xf32>
    %282 = arith.addf %280, %281 : vector<8x128xf32>
    %cst_112 = arith.constant 5.000000e-01 : f32
    %283 = vector.broadcast %cst_112 : f32 to vector<8x128xf32>
    %284 = arith.mulf %283, %282 : vector<8x128xf32>
    %285 = arith.mulf %274, %247 : vector<8x128xf32>
    %286 = arith.mulf %266, %276 : vector<8x128xf32>
    %287 = arith.addf %285, %286 : vector<8x128xf32>
    %288 = math.tanh %287 : vector<8x128xf32>
    %289 = arith.mulf %284, %288 : vector<8x128xf32>
    %290 = arith.index_cast %c6_i32 : i32 to index
    %c0_113 = arith.constant 0 : index
    %c0_114 = arith.constant 0 : index
    %291 = vector.load %arg6[%290, %c0_113, %c0_114] : memref<8x8x128xf32, #tpu.memory_space<vmem>>, vector<1x8x128xf32>
    %292 = vector.shape_cast %291 : vector<1x8x128xf32> to vector<8x128xf32>
    %293 = vector.shape_cast %289 : vector<8x128xf32> to vector<1x8x128xf32>
    tpu.vector_store %arg6[%290, %c0_113, %c0_114], %293 {strides = array<i32>} : memref<8x8x128xf32, #tpu.memory_space<vmem>>, vector<1x8x128xf32>,
    %c7_i32 = arith.constant 7 : i32
    %294 = arith.index_cast %c7_i32 : i32 to index
    %c0_115 = arith.constant 0 : index
    %c0_116 = arith.constant 0 : index
    %295 = vector.load %arg8[%294, %c0_115, %c0_116] : memref<8x8x512xf32, #tpu.memory_space<vmem>>, vector<1x8x512xf32>
    %296 = vector.shape_cast %295 : vector<1x8x512xf32> to vector<8x512xf32>
    %cst_117 = arith.constant dense<0.000000e+00> : vector<8x512xf32>
    %297 = tpu.matmul %289, %11, %cst_117 {dimension_numbers = #tpu.dot_dimension_numbers<[1], [0], [0], [1], [0, 0, 1, 1], [], []>} : vector<8x128xf32>, vector<128x512xf32>, vector<8x512xf32> -> vector<8x512xf32>
    %298 = arith.addf %296, %297 : vector<8x512xf32>
    %299 = vector.extract_strided_slice %298 {offsets = [0, 0], sizes = [8, 128], strides = [1, 1]} : vector<8x512xf32> to vector<8x128xf32>
    %cst_118 = arith.constant 5.000000e-01 : f32
    %300 = vector.broadcast %cst_118 : f32 to vector<8x128xf32>
    %301 = arith.mulf %300, %299 : vector<8x128xf32>
    %302 = math.tanh %301 : vector<8x128xf32>
    %cst_119 = arith.constant 1.000000e+00 : f32
    %303 = vector.broadcast %cst_119 : f32 to vector<8x128xf32>
    %304 = arith.addf %302, %303 : vector<8x128xf32>
    %cst_120 = arith.constant 5.000000e-01 : f32
    %305 = vector.broadcast %cst_120 : f32 to vector<8x128xf32>
    %306 = arith.mulf %305, %304 : vector<8x128xf32>
    %307 = vector.extract_strided_slice %298 {offsets = [0, 128], sizes = [8, 128], strides = [1, 1]} : vector<8x512xf32> to vector<8x128xf32>
    %cst_121 = arith.constant 5.000000e-01 : f32
    %308 = vector.broadcast %cst_121 : f32 to vector<8x128xf32>
    %309 = arith.mulf %308, %307 : vector<8x128xf32>
    %310 = math.tanh %309 : vector<8x128xf32>
    %cst_122 = arith.constant 1.000000e+00 : f32
    %311 = vector.broadcast %cst_122 : f32 to vector<8x128xf32>
    %312 = arith.addf %310, %311 : vector<8x128xf32>
    %cst_123 = arith.constant 5.000000e-01 : f32
    %313 = vector.broadcast %cst_123 : f32 to vector<8x128xf32>
    %314 = arith.mulf %313, %312 : vector<8x128xf32>
    %315 = vector.extract_strided_slice %298 {offsets = [0, 256], sizes = [8, 128], strides = [1, 1]} : vector<8x512xf32> to vector<8x128xf32>
    %316 = math.tanh %315 : vector<8x128xf32>
    %317 = vector.extract_strided_slice %298 {offsets = [0, 384], sizes = [8, 128], strides = [1, 1]} : vector<8x512xf32> to vector<8x128xf32>
    %cst_124 = arith.constant 5.000000e-01 : f32
    %318 = vector.broadcast %cst_124 : f32 to vector<8x128xf32>
    %319 = arith.mulf %318, %317 : vector<8x128xf32>
    %320 = math.tanh %319 : vector<8x128xf32>
    %cst_125 = arith.constant 1.000000e+00 : f32
    %321 = vector.broadcast %cst_125 : f32 to vector<8x128xf32>
    %322 = arith.addf %320, %321 : vector<8x128xf32>
    %cst_126 = arith.constant 5.000000e-01 : f32
    %323 = vector.broadcast %cst_126 : f32 to vector<8x128xf32>
    %324 = arith.mulf %323, %322 : vector<8x128xf32>
    %325 = arith.mulf %314, %287 : vector<8x128xf32>
    %326 = arith.mulf %306, %316 : vector<8x128xf32>
    %327 = arith.addf %325, %326 : vector<8x128xf32>
    %328 = math.tanh %327 : vector<8x128xf32>
    %329 = arith.mulf %324, %328 : vector<8x128xf32>
    %330 = arith.index_cast %c7_i32 : i32 to index
    %c0_127 = arith.constant 0 : index
    %c0_128 = arith.constant 0 : index
    %331 = vector.load %arg6[%330, %c0_127, %c0_128] : memref<8x8x128xf32, #tpu.memory_space<vmem>>, vector<1x8x128xf32>
    %332 = vector.shape_cast %331 : vector<1x8x128xf32> to vector<8x128xf32>
    %333 = vector.shape_cast %329 : vector<8x128xf32> to vector<1x8x128xf32>
    tpu.vector_store %arg6[%330, %c0_127, %c0_128], %333 {strides = array<i32>} : memref<8x8x128xf32, #tpu.memory_space<vmem>>, vector<1x8x128xf32>,
    %c8_i32 = arith.constant 8 : i32
    %c0_129 = arith.constant 0 : index
    %c0_130 = arith.constant 0 : index
    %334 = vector.load %arg9[%c0_129, %c0_130] : memref<8x128xf32, #tpu.memory_space<vmem>>, vector<8x128xf32>
    tpu.vector_store %arg9[%c0_129, %c0_130], %329 {strides = array<i32>} : memref<8x128xf32, #tpu.memory_space<vmem>>, vector<8x128xf32>,
    %c0_131 = arith.constant 0 : index
    %c0_132 = arith.constant 0 : index
    %335 = vector.load %arg10[%c0_131, %c0_132] : memref<8x128xf32, #tpu.memory_space<vmem>>, vector<8x128xf32>
    tpu.vector_store %arg10[%c0_131, %c0_132], %327 {strides = array<i32>} : memref<8x128xf32, #tpu.memory_space<vmem>>, vector<8x128xf32>,
    %c0_i32_133 = arith.constant 0 : i32
    %336 = arith.cmpi eq, %arg1, %c0_i32_133 : i32
    %337 = arith.extui %336 : i1 to i32
    %c0_i32_134 = arith.constant 0 : i32
    %338 = arith.cmpi ne, %337, %c0_i32_134 : i32
    scf.if %338 {
      %c0_135 = arith.constant 0 : index
      %c0_136 = arith.constant 0 : index
      %339 = vector.load %arg7[%c0_135, %c0_136] : memref<8x128xf32, #tpu.memory_space<vmem>>, vector<8x128xf32>
      tpu.vector_store %arg7[%c0_135, %c0_136], %327 {strides = array<i32>} : memref<8x128xf32, #tpu.memory_space<vmem>>, vector<8x128xf32>,
    } else {
    }
    return
  }
  func.func @transform_0(%arg0: i32, %arg1: i32) -> (i32, i32, i32) {
    %c0_i32 = arith.constant 0 : i32
    %c0_i32_0 = arith.constant 0 : i32
    return %arg1, %arg0, %c0_i32 : i32, i32, i32
  }
  func.func @transform_1(%arg0: i32, %arg1: i32) -> (i32, i32) {
    %c0_i32 = arith.constant 0 : i32
    %c0_i32_0 = arith.constant 0 : i32
    %c0_i32_1 = arith.constant 0 : i32
    return %c0_i32, %c0_i32_0 : i32, i32
  }
  func.func @transform_2(%arg0: i32, %arg1: i32) -> (i32, i32) {
    %c0_i32 = arith.constant 0 : i32
    %c0_i32_0 = arith.constant 0 : i32
    %c0_i32_1 = arith.constant 0 : i32
    return %c0_i32, %c0_i32_0 : i32, i32
  }
  func.func @transform_3(%arg0: i32, %arg1: i32) -> (i32, i32) {
    %c0_i32 = arith.constant 0 : i32
    %c0_i32_0 = arith.constant 0 : i32
    %c0_i32_1 = arith.constant 0 : i32
    return %c0_i32, %c0_i32_0 : i32, i32
  }
  func.func @transform_4(%arg0: i32, %arg1: i32) -> (i32, i32, i32) {
    %c0_i32 = arith.constant 0 : i32
    %c0_i32_0 = arith.constant 0 : i32
    return %arg1, %arg0, %c0_i32 : i32, i32, i32
  }
  func.func @transform_5(%arg0: i32, %arg1: i32) -> (i32, i32) {
    %c0_i32 = arith.constant 0 : i32
    %c0_i32_0 = arith.constant 0 : i32
    return %arg0, %c0_i32 : i32, i32
  }
}

</mosaic_0001>

<llo_original>
// kernel: encoder_forward.2
$region0: #{encoder_forward.2}
  #allocation0 [shape = 'u32[]', space=smem, size = 0x4, offset = 0x4, fixed_abs, tag = 'smem constant byte address 0x4 - core index']
  #allocation1 [shape = 'u32[144,128]{1,0:T(1,128)}', space=vmem, size = 0x12000, scoped, tag = 'internal scratch']
  #allocation2 [shape = 'f32[8,8,512]{2,1,0:T(8,128)}', space=vmem, size = 0x20000, scoped, tag = 'scratch operand']
  #allocation3 [shape = 'f32[8,128]{1,0:T(8,128)}', space=vmem, size = 0x1000, scoped, tag = 'scratch operand']
  #allocation4 [shape = 'f32[8,128]{1,0:T(8,128)}', space=vmem, size = 0x1000, scoped, tag = 'scratch operand']
  %s0 = inlined_call_operand.vmem [shape: f32[8,8,128], index: 0, kind: input, shape index: {}]
  %s1 = inlined_call_operand.vmem [shape: f32[128,512], index: 1, kind: input, shape index: {}]
  %s2 = inlined_call_operand.vmem [shape: f32[128,512], index: 2, kind: input, shape index: {}]
  %s3 = inlined_call_operand.vmem [shape: f32[1,512], index: 3, kind: input, shape index: {}]
  %s4 = inlined_call_operand.vmem [shape: f32[8,8,128], index: 4, kind: output, shape index: {0}]
  %s5 = inlined_call_operand.vmem [shape: f32[8,128], index: 5, kind: output, shape index: {1}]
  %6 = xla_tuple %s4, %s5
  %s7 = sld [smem:[#allocation0]]
  $region42: #{encoder_forward.2} parent=0
    _
  %s9 = ssub.s32 1, %s7
  %s10 = scalar_select 0, %s9, %s7
  // Predicated region
  $region2: #{encoder_forward.2} parent=0 // pred_check
    _
  $region3: #{encoder_forward.2} parent=0 // pred_check_branch
    %12 = sbr.rel (0) target = $region5
  $region4: #{encoder_forward.2} parent=0 // pred_region
    _
  $region5: #{encoder_forward.2} parent=0 // pred_fallthru
    _
  // Predicated region
  $region6: #{encoder_forward.2} parent=0 // pred_check
    _
  $region7: #{encoder_forward.2} parent=0 // pred_check_branch
    %14 = sbr.rel (0) target = $region9
  $region8: #{encoder_forward.2} parent=0 // pred_region
    _
  $region9: #{encoder_forward.2} parent=0 // pred_fallthru
    _
  // Predicated region
  $region10: #{encoder_forward.2} parent=0 // pred_check
    _
  $region11: #{encoder_forward.2} parent=0 // pred_check_branch
    %16 = sbr.rel (0) target = $region13
  $region12: #{encoder_forward.2} parent=0 // pred_region
    _
  $region13: #{encoder_forward.2} parent=0 // pred_fallthru
    _
  // Predicated region
  $region14: #{encoder_forward.2} parent=0 // pred_check
    _
  $region15: #{encoder_forward.2} parent=0 // pred_check_branch
    %18 = sbr.rel (0) target = $region17
  $region16: #{encoder_forward.2} parent=0 // pred_region
    _
  $region17: #{encoder_forward.2} parent=0 // pred_fallthru
    _
  %p19 = scmp.eq.s32.totalorder 0, 0
  // Predicated region
  $region18: #{encoder_forward.2} parent=0 // pred_check
    %p20 = pneg %p19
  $region19: #{encoder_forward.2} parent=0 // pred_check_branch
    %22 = sbr.rel (%p20) target = $region21
  $region20: #{encoder_forward.2} parent=0 // pred_region
    %23 = vst [vmem:[#allocation3] sm:$0xff] 0.0
    %24 = vst [vmem:[#allocation4] sm:$0xff] 0.0
  $region21: #{encoder_forward.2} parent=0 // pred_fallthru
    _
  %v25 = vld [vmem:[%s0] sm:$0xff]
  %v26 = vld [vmem:[%s0 + $0x8] sm:$0xff]
  %v27 = vld [vmem:[%s0 + $0x10] sm:$0xff]
  %v28 = vld [vmem:[%s0 + $0x18] sm:$0xff]
  %v29 = vld [vmem:[%s0 + $0x20] sm:$0xff]
  %v30 = vld [vmem:[%s0 + $0x28] sm:$0xff]
  %v31 = vld [vmem:[%s0 + $0x30] sm:$0xff]
  %v32 = vld [vmem:[%s0 + $0x38] sm:$0xff]
  %v33 = vld [vmem:[%s1] sm:$0xff]
  %v34 = vld [vmem:[%s1 + $0x8] sm:$0xff]
  %v35 = vld [vmem:[%s1 + $0x10] sm:$0xff]
  %v36 = vld [vmem:[%s1 + $0x18] sm:$0xff]
  %v37 = vld [vmem:[%s1 + $0x20] sm:$0xff]
  %v38 = vld [vmem:[%s1 + $0x28] sm:$0xff]
  %v39 = vld [vmem:[%s1 + $0x30] sm:$0xff]
  %v40 = vld [vmem:[%s1 + $0x38] sm:$0xff]
  %v41 = vld [vmem:[%s1 + $0x40] sm:$0xff]
  %v42 = vld [vmem:[%s1 + $0x48] sm:$0xff]
  %v43 = vld [vmem:[%s1 + $0x50] sm:$0xff]
  %v44 = vld [vmem:[%s1 + $0x58] sm:$0xff]
  %v45 = vld [vmem:[%s1 + $0x60] sm:$0xff]
  %v46 = vld [vmem:[%s1 + $0x68] sm:$0xff]
  %v47 = vld [vmem:[%s1 + $0x70] sm:$0xff]
  %v48 = vld [vmem:[%s1 + $0x78] sm:$0xff]
  %v49 = vld [vmem:[%s1 + $0x80] sm:$0xff]
  %v50 = vld [vmem:[%s1 + $0x88] sm:$0xff]
  %v51 = vld [vmem:[%s1 + $0x90] sm:$0xff]
  %v52 = vld [vmem:[%s1 + $0x98] sm:$0xff]
  %v53 = vld [vmem:[%s1 + $0xa0] sm:$0xff]
  %v54 = vld [vmem:[%s1 + $0xa8] sm:$0xff]
  %v55 = vld [vmem:[%s1 + $0xb0] sm:$0xff]
  %v56 = vld [vmem:[%s1 + $0xb8] sm:$0xff]
  %v57 = vld [vmem:[%s1 + $0xc0] sm:$0xff]
  %v58 = vld [vmem:[%s1 + $0xc8] sm:$0xff]
  %v59 = vld [vmem:[%s1 + $0xd0] sm:$0xff]
  %v60 = vld [vmem:[%s1 + $0xd8] sm:$0xff]
  %v61 = vld [vmem:[%s1 + $0xe0] sm:$0xff]
  %v62 = vld [vmem:[%s1 + $0xe8] sm:$0xff]
  %v63 = vld [vmem:[%s1 + $0xf0] sm:$0xff]
  %v64 = vld [vmem:[%s1 + $0xf8] sm:$0xff]
  %v65 = vld [vmem:[%s1 + $0x100] sm:$0xff]
  %v66 = vld [vmem:[%s1 + $0x108] sm:$0xff]
  %v67 = vld [vmem:[%s1 + $0x110] sm:$0xff]
  %v68 = vld [vmem:[%s1 + $0x118] sm:$0xff]
  %v69 = vld [vmem:[%s1 + $0x120] sm:$0xff]
  %v70 = vld [vmem:[%s1 + $0x128] sm:$0xff]
  %v71 = vld [vmem:[%s1 + $0x130] sm:$0xff]
  %v72 = vld [vmem:[%s1 + $0x138] sm:$0xff]
  %v73 = vld [vmem:[%s1 + $0x140] sm:$0xff]
  %v74 = vld [vmem:[%s1 + $0x148] sm:$0xff]
  %v75 = vld [vmem:[%s1 + $0x150] sm:$0xff]
  %v76 = vld [vmem:[%s1 + $0x158] sm:$0xff]
  %v77 = vld [vmem:[%s1 + $0x160] sm:$0xff]
  %v78 = vld [vmem:[%s1 + $0x168] sm:$0xff]
  %v79 = vld [vmem:[%s1 + $0x170] sm:$0xff]
  %v80 = vld [vmem:[%s1 + $0x178] sm:$0xff]
  %v81 = vld [vmem:[%s1 + $0x180] sm:$0xff]
  %v82 = vld [vmem:[%s1 + $0x188] sm:$0xff]
  %v83 = vld [vmem:[%s1 + $0x190] sm:$0xff]
  %v84 = vld [vmem:[%s1 + $0x198] sm:$0xff]
  %v85 = vld [vmem:[%s1 + $0x1a0] sm:$0xff]
  %v86 = vld [vmem:[%s1 + $0x1a8] sm:$0xff]
  %v87 = vld [vmem:[%s1 + $0x1b0] sm:$0xff]
  %v88 = vld [vmem:[%s1 + $0x1b8] sm:$0xff]
  %v89 = vld [vmem:[%s1 + $0x1c0] sm:$0xff]
  %v90 = vld [vmem:[%s1 + $0x1c8] sm:$0xff]
  %v91 = vld [vmem:[%s1 + $0x1d0] sm:$0xff]
  %v92 = vld [vmem:[%s1 + $0x1d8] sm:$0xff]
  %v93 = vld [vmem:[%s1 + $0x1e0] sm:$0xff]
  %v94 = vld [vmem:[%s1 + $0x1e8] sm:$0xff]
  %v95 = vld [vmem:[%s1 + $0x1f0] sm:$0xff]
  %v96 = vld [vmem:[%s1 + $0x1f8] sm:$0xff]
  %v97 = vld [vmem:[%s3] sm:$0xf]
  %v99 = vlaneseq
  %v100 = vshrl.u32 %v99, 7
  %v101 = vsub.s32 0, %v100
  %v102 = vrot.slane %v97, %v101
  %v103 = vlaneseq
  %v104 = vshrl.u32 %v103, 7
  %v105 = vsub.s32 1, %v104
  %v106 = vrot.slane %v97, %v105
  %v107 = vlaneseq
  %v108 = vshrl.u32 %v107, 7
  %v109 = vsub.s32 2, %v108
  %v110 = vrot.slane %v97, %v109
  %v111 = vlaneseq
  %v112 = vshrl.u32 %v111, 7
  %v113 = vsub.s32 3, %v112
  %v114 = vrot.slane %v97, %v113
  %119 = vmatprep.subr.mxu0 %v94
  %120 = vmatpush1.msra.mxu0 %v93
  %121 = vmatprep.subr.mxu0 %v90
  %122 = vmatpush1.msra.mxu0 %v89
  %123 = vmatprep.subr.mxu0 %v86
  %124 = vmatpush1.msra.mxu0 %v85
  %125 = vmatprep.subr.mxu0 %v82
  %126 = vmatpush1.msra.mxu0 %v81
  %127 = vmatprep.subr.mxu0 %v78
  %128 = vmatpush1.msra.mxu0 %v77
  %129 = vmatprep.subr.mxu0 %v74
  %130 = vmatpush1.msra.mxu0 %v73
  %131 = vmatprep.subr.mxu0 %v70
  %132 = vmatpush1.msra.mxu0 %v69
  %133 = vmatprep.subr.mxu0 %v66
  %134 = vmatpush1.msra.mxu0 %v65
  %135 = vmatprep.subr.mxu0 %v62
  %136 = vmatpush1.msra.mxu0 %v61
  %137 = vmatprep.subr.mxu0 %v58
  %138 = vmatpush1.msra.mxu0 %v57
  %139 = vmatprep.subr.mxu0 %v54
  %140 = vmatpush1.msra.mxu0 %v53
  %141 = vmatprep.subr.mxu0 %v50
  %142 = vmatpush1.msra.mxu0 %v49
  %143 = vmatprep.subr.mxu0 %v46
  %144 = vmatpush1.msra.mxu0 %v45
  %145 = vmatprep.subr.mxu0 %v42
  %146 = vmatpush1.msra.mxu0 %v41
  %147 = vmatprep.subr.mxu0 %v38
  %148 = vmatpush1.msra.mxu0 %v37
  %149 = vmatprep.subr.mxu0 %v34
  %150 = vmatpush1.msra.mxu0 %v33
  %151 = vmatprep.subr.mxu0 0.0
  %152 = vmatpush2.msra.mxu0 0.0
  %153 = vmatprep.subr.mxu0 0.0
  %154 = vmatpush2.msra.mxu0 0.0
  %155 = vmatprep.subr.mxu0 0.0
  %156 = vmatpush2.msra.mxu0 0.0
  %157 = vmatprep.subr.mxu0 0.0
  %158 = vmatpush2.msra.mxu0 0.0
  %159 = vmatprep.subr.mxu0 0.0
  %160 = vmatpush2.msra.mxu0 0.0
  %161 = vmatprep.subr.mxu0 0.0
  %162 = vmatpush2.msra.mxu0 0.0
  %163 = vmatprep.subr.mxu0 0.0
  %164 = vmatpush2.msra.mxu0 0.0
  %165 = vmatprep.subr.mxu0 0.0
  %166 = vmatpush2.msra.mxu0 0.0
  %167 = vmatprep.subr.mxu0 0.0
  %168 = vmatpush2.msra.mxu0 0.0
  %169 = vmatprep.subr.mxu0 0.0
  %170 = vmatpush2.msra.mxu0 0.0
  %171 = vmatprep.subr.mxu0 0.0
  %172 = vmatpush2.msra.mxu0 0.0
  %173 = vmatprep.subr.mxu0 0.0
  %174 = vmatpush2.msra.mxu0 0.0
  %175 = vmatprep.subr.mxu0 0.0
  %176 = vmatpush2.msra.mxu0 0.0
  %177 = vmatprep.subr.mxu0 0.0
  %178 = vmatpush2.msra.mxu0 0.0
  %179 = vmatprep.subr.mxu0 0.0
  %180 = vmatpush2.msra.mxu0 0.0
  %181 = vmatprep.subr.mxu0 0.0
  %182 = vmatpush2.msra.mxu0 0.0
  %183 = vmatprep.mubr.f32.mxu0 0.0
  %184 = vmatmul.mubr.f32.gmra.mxu0 %v25
  %v185 = vpop.f32.mrf.mxu0
  %v186 = vadd.f32 %v102, %v185
  %v187 = vpop.f32.mrf.mxu0
  %v188 = vadd.f32 %v106, %v187
  %189 = vmatprep.mubr.f32.mxu0 0.0
  %190 = vmatmul.mubr.f32.gmra.mxu0 %v26
  %v191 = vpop.f32.mrf.mxu0
  %v192 = vadd.f32 %v102, %v191
  %v193 = vpop.f32.mrf.mxu0
  %v194 = vadd.f32 %v106, %v193
  %195 = vmatprep.mubr.f32.mxu0 0.0
  %196 = vmatmul.mubr.f32.gmra.mxu0 %v27
  %v197 = vpop.f32.mrf.mxu0
  %v198 = vadd.f32 %v102, %v197
  %v199 = vpop.f32.mrf.mxu0
  %v200 = vadd.f32 %v106, %v199
  %201 = vmatprep.mubr.f32.mxu0 0.0
  %202 = vmatmul.mubr.f32.gmra.mxu0 %v28
  %v203 = vpop.f32.mrf.mxu0
  %v204 = vadd.f32 %v102, %v203
  %v205 = vpop.f32.mrf.mxu0
  %v206 = vadd.f32 %v106, %v205
  %207 = vmatprep.mubr.f32.mxu0 0.0
  %208 = vmatmul.mubr.f32.gmra.mxu0 %v29
  %v209 = vpop.f32.mrf.mxu0
  %v210 = vadd.f32 %v102, %v209
  %v211 = vpop.f32.mrf.mxu0
  %v212 = vadd.f32 %v106, %v211
  %213 = vmatprep.mubr.f32.mxu0 0.0
  %214 = vmatmul.mubr.f32.gmra.mxu0 %v30
  %v215 = vpop.f32.mrf.mxu0
  %v216 = vadd.f32 %v102, %v215
  %v217 = vpop.f32.mrf.mxu0
  %v218 = vadd.f32 %v106, %v217
  %219 = vmatprep.mubr.f32.mxu0 0.0
  %220 = vmatmul.mubr.f32.gmra.mxu0 %v31
  %v221 = vpop.f32.mrf.mxu0
  %v222 = vadd.f32 %v102, %v221
  %v223 = vpop.f32.mrf.mxu0
  %v224 = vadd.f32 %v106, %v223
  %225 = vmatprep.mubr.f32.mxu0 0.0
  %226 = vmatmul.mubr.f32.gmra.mxu0 %v32
  %v227 = vpop.f32.mrf.mxu0
  %v228 = vadd.f32 %v102, %v227
  %v229 = vpop.f32.mrf.mxu0
  %v230 = vadd.f32 %v106, %v229
  %231 = vdwg.mxu0
  %232 = vmatprep.subr.mxu0 %v96
  %233 = vmatpush1.msra.mxu0 %v95
  %234 = vmatprep.subr.mxu0 %v92
  %235 = vmatpush1.msra.mxu0 %v91
  %236 = vmatprep.subr.mxu0 %v88
  %237 = vmatpush1.msra.mxu0 %v87
  %238 = vmatprep.subr.mxu0 %v84
  %239 = vmatpush1.msra.mxu0 %v83
  %240 = vmatprep.subr.mxu0 %v80
  %241 = vmatpush1.msra.mxu0 %v79
  %242 = vmatprep.subr.mxu0 %v76
  %243 = vmatpush1.msra.mxu0 %v75
  %244 = vmatprep.subr.mxu0 %v72
  %245 = vmatpush1.msra.mxu0 %v71
  %246 = vmatprep.subr.mxu0 %v68
  %247 = vmatpush1.msra.mxu0 %v67
  %248 = vmatprep.subr.mxu0 %v64
  %249 = vmatpush1.msra.mxu0 %v63
  %250 = vmatprep.subr.mxu0 %v60
  %251 = vmatpush1.msra.mxu0 %v59
  %252 = vmatprep.subr.mxu0 %v56
  %253 = vmatpush1.msra.mxu0 %v55
  %254 = vmatprep.subr.mxu0 %v52
  %255 = vmatpush1.msra.mxu0 %v51
  %256 = vmatprep.subr.mxu0 %v48
  %257 = vmatpush1.msra.mxu0 %v47
  %258 = vmatprep.subr.mxu0 %v44
  %259 = vmatpush1.msra.mxu0 %v43
  %260 = vmatprep.subr.mxu0 %v40
  %261 = vmatpush1.msra.mxu0 %v39
  %262 = vmatprep.subr.mxu0 %v36
  %263 = vmatpush1.msra.mxu0 %v35
  %264 = vmatprep.subr.mxu0 0.0
  %265 = vmatpush2.msra.mxu0 0.0
  %266 = vmatprep.subr.mxu0 0.0
  %267 = vmatpush2.msra.mxu0 0.0
  %268 = vmatprep.subr.mxu0 0.0
  %269 = vmatpush2.msra.mxu0 0.0
  %270 = vmatprep.subr.mxu0 0.0
  %271 = vmatpush2.msra.mxu0 0.0
  %272 = vmatprep.subr.mxu0 0.0
  %273 = vmatpush2.msra.mxu0 0.0
  %274 = vmatprep.subr.mxu0 0.0
  %275 = vmatpush2.msra.mxu0 0.0
  %276 = vmatprep.subr.mxu0 0.0
  %277 = vmatpush2.msra.mxu0 0.0
  %278 = vmatprep.subr.mxu0 0.0
  %279 = vmatpush2.msra.mxu0 0.0
  %280 = vmatprep.subr.mxu0 0.0
  %281 = vmatpush2.msra.mxu0 0.0
  %282 = vmatprep.subr.mxu0 0.0
  %283 = vmatpush2.msra.mxu0 0.0
  %284 = vmatprep.subr.mxu0 0.0
  %285 = vmatpush2.msra.mxu0 0.0
  %286 = vmatprep.subr.mxu0 0.0
  %287 = vmatpush2.msra.mxu0 0.0
  %288 = vmatprep.subr.mxu0 0.0
  %289 = vmatpush2.msra.mxu0 0.0
  %290 = vmatprep.subr.mxu0 0.0
  %291 = vmatpush2.msra.mxu0 0.0
  %292 = vmatprep.subr.mxu0 0.0
  %293 = vmatpush2.msra.mxu0 0.0
  %294 = vmatprep.subr.mxu0 0.0
  %295 = vmatpush2.msra.mxu0 0.0
  %296 = vmatprep.mubr.f32.mxu0 0.0
  %297 = vmatmul.mubr.f32.gmra.mxu0 %v25
  %v298 = vpop.f32.mrf.mxu0
  %v299 = vadd.f32 %v110, %v298
  %v300 = vpop.f32.mrf.mxu0
  %v301 = vadd.f32 %v114, %v300
  %302 = vmatprep.mubr.f32.mxu0 0.0
  %303 = vmatmul.mubr.f32.gmra.mxu0 %v26
  %v304 = vpop.f32.mrf.mxu0
  %v305 = vadd.f32 %v110, %v304
  %v306 = vpop.f32.mrf.mxu0
  %v307 = vadd.f32 %v114, %v306
  %308 = vmatprep.mubr.f32.mxu0 0.0
  %309 = vmatmul.mubr.f32.gmra.mxu0 %v27
  %v310 = vpop.f32.mrf.mxu0
  %v311 = vadd.f32 %v110, %v310
  %v312 = vpop.f32.mrf.mxu0
  %v313 = vadd.f32 %v114, %v312
  %314 = vmatprep.mubr.f32.mxu0 0.0
  %315 = vmatmul.mubr.f32.gmra.mxu0 %v28
  %v316 = vpop.f32.mrf.mxu0
  %v317 = vadd.f32 %v110, %v316
  %v318 = vpop.f32.mrf.mxu0
  %v319 = vadd.f32 %v114, %v318
  %320 = vmatprep.mubr.f32.mxu0 0.0
  %321 = vmatmul.mubr.f32.gmra.mxu0 %v29
  %v322 = vpop.f32.mrf.mxu0
  %v323 = vadd.f32 %v110, %v322
  %v324 = vpop.f32.mrf.mxu0
  %v325 = vadd.f32 %v114, %v324
  %326 = vmatprep.mubr.f32.mxu0 0.0
  %327 = vmatmul.mubr.f32.gmra.mxu0 %v30
  %v328 = vpop.f32.mrf.mxu0
  %v329 = vadd.f32 %v110, %v328
  %v330 = vpop.f32.mrf.mxu0
  %v331 = vadd.f32 %v114, %v330
  %332 = vmatprep.mubr.f32.mxu0 0.0
  %333 = vmatmul.mubr.f32.gmra.mxu0 %v31
  %v334 = vpop.f32.mrf.mxu0
  %v335 = vadd.f32 %v110, %v334
  %v336 = vpop.f32.mrf.mxu0
  %v337 = vadd.f32 %v114, %v336
  %338 = vmatprep.mubr.f32.mxu0 0.0
  %339 = vmatmul.mubr.f32.gmra.mxu0 %v32
  %v340 = vpop.f32.mrf.mxu0
  %v341 = vadd.f32 %v110, %v340
  %v342 = vpop.f32.mrf.mxu0
  %v343 = vadd.f32 %v114, %v342
  %344 = vdwg.mxu0
  %345 = vst [vmem:[#allocation2] sm:$0xff] %v186
  %346 = vst [vmem:[#allocation2 + $0x8] sm:$0xff] %v188
  %347 = vst [vmem:[#allocation2 + $0x10] sm:$0xff] %v299
  %348 = vst [vmem:[#allocation2 + $0x18] sm:$0xff] %v301
  %349 = vst [vmem:[#allocation2 + $0x20] sm:$0xff] %v192
  %350 = vst [vmem:[#allocation2 + $0x28] sm:$0xff] %v194
  %351 = vst [vmem:[#allocation2 + $0x30] sm:$0xff] %v305
  %352 = vst [vmem:[#allocation2 + $0x38] sm:$0xff] %v307
  %353 = vst [vmem:[#allocation2 + $0x40] sm:$0xff] %v198
  %354 = vst [vmem:[#allocation2 + $0x48] sm:$0xff] %v200
  %355 = vst [vmem:[#allocation2 + $0x50] sm:$0xff] %v311
  %356 = vst [vmem:[#allocation2 + $0x58] sm:$0xff] %v313
  %357 = vst [vmem:[#allocation2 + $0x60] sm:$0xff] %v204
  %358 = vst [vmem:[#allocation2 + $0x68] sm:$0xff] %v206
  %359 = vst [vmem:[#allocation2 + $0x70] sm:$0xff] %v317
  %360 = vst [vmem:[#allocation2 + $0x78] sm:$0xff] %v319
  %361 = vst [vmem:[#allocation2 + $0x80] sm:$0xff] %v210
  %362 = vst [vmem:[#allocation2 + $0x88] sm:$0xff] %v212
  %363 = vst [vmem:[#allocation2 + $0x90] sm:$0xff] %v323
  %364 = vst [vmem:[#allocation2 + $0x98] sm:$0xff] %v325
  %365 = vst [vmem:[#allocation2 + $0xa0] sm:$0xff] %v216
  %366 = vst [vmem:[#allocation2 + $0xa8] sm:$0xff] %v218
  %367 = vst [vmem:[#allocation2 + $0xb0] sm:$0xff] %v329
  %368 = vst [vmem:[#allocation2 + $0xb8] sm:$0xff] %v331
  %369 = vst [vmem:[#allocation2 + $0xc0] sm:$0xff] %v222
  %370 = vst [vmem:[#allocation2 + $0xc8] sm:$0xff] %v224
  %371 = vst [vmem:[#allocation2 + $0xd0] sm:$0xff] %v335
  %372 = vst [vmem:[#allocation2 + $0xd8] sm:$0xff] %v337
  %373 = vst [vmem:[#allocation2 + $0xe0] sm:$0xff] %v228
  %374 = vst [vmem:[#allocation2 + $0xe8] sm:$0xff] %v230
  %375 = vst [vmem:[#allocation2 + $0xf0] sm:$0xff] %v341
  %376 = vst [vmem:[#allocation2 + $0xf8] sm:$0xff] %v343
  %v377 = vld [vmem:[%s2] sm:$0xff]
  %v378 = vld [vmem:[%s2 + $0x8] sm:$0xff]
  %v379 = vld [vmem:[%s2 + $0x10] sm:$0xff]
  %v380 = vld [vmem:[%s2 + $0x18] sm:$0xff]
  %v381 = vld [vmem:[%s2 + $0x20] sm:$0xff]
  %v382 = vld [vmem:[%s2 + $0x28] sm:$0xff]
  %v383 = vld [vmem:[%s2 + $0x30] sm:$0xff]
  %v384 = vld [vmem:[%s2 + $0x38] sm:$0xff]
  %v385 = vld [vmem:[%s2 + $0x40] sm:$0xff]
  %v386 = vld [vmem:[%s2 + $0x48] sm:$0xff]
  %v387 = vld [vmem:[%s2 + $0x50] sm:$0xff]
  %v388 = vld [vmem:[%s2 + $0x58] sm:$0xff]
  %v389 = vld [vmem:[%s2 + $0x60] sm:$0xff]
  %v390 = vld [vmem:[%s2 + $0x68] sm:$0xff]
  %v391 = vld [vmem:[%s2 + $0x70] sm:$0xff]
  %v392 = vld [vmem:[%s2 + $0x78] sm:$0xff]
  %v393 = vld [vmem:[%s2 + $0x80] sm:$0xff]
  %v394 = vld [vmem:[%s2 + $0x88] sm:$0xff]
  %v395 = vld [vmem:[%s2 + $0x90] sm:$0xff]
  %v396 = vld [vmem:[%s2 + $0x98] sm:$0xff]
  %v397 = vld [vmem:[%s2 + $0xa0] sm:$0xff]
  %v398 = vld [vmem:[%s2 + $0xa8] sm:$0xff]
  %v399 = vld [vmem:[%s2 + $0xb0] sm:$0xff]
  %v400 = vld [vmem:[%s2 + $0xb8] sm:$0xff]
  %v401 = vld [vmem:[%s2 + $0xc0] sm:$0xff]
  %v402 = vld [vmem:[%s2 + $0xc8] sm:$0xff]
  %v403 = vld [vmem:[%s2 + $0xd0] sm:$0xff]
  %v404 = vld [vmem:[%s2 + $0xd8] sm:$0xff]
  %v405 = vld [vmem:[%s2 + $0xe0] sm:$0xff]
  %v406 = vld [vmem:[%s2 + $0xe8] sm:$0xff]
  %v407 = vld [vmem:[%s2 + $0xf0] sm:$0xff]
  %v408 = vld [vmem:[%s2 + $0xf8] sm:$0xff]
  %v409 = vld [vmem:[%s2 + $0x100] sm:$0xff]
  %v410 = vld [vmem:[%s2 + $0x108] sm:$0xff]
  %v411 = vld [vmem:[%s2 + $0x110] sm:$0xff]
  %v412 = vld [vmem:[%s2 + $0x118] sm:$0xff]
  %v413 = vld [vmem:[%s2 + $0x120] sm:$0xff]
  %v414 = vld [vmem:[%s2 + $0x128] sm:$0xff]
  %v415 = vld [vmem:[%s2 + $0x130] sm:$0xff]
  %v416 = vld [vmem:[%s2 + $0x138] sm:$0xff]
  %v417 = vld [vmem:[%s2 + $0x140] sm:$0xff]
  %v418 = vld [vmem:[%s2 + $0x148] sm:$0xff]
  %v419 = vld [vmem:[%s2 + $0x150] sm:$0xff]
  %v420 = vld [vmem:[%s2 + $0x158] sm:$0xff]
  %v421 = vld [vmem:[%s2 + $0x160] sm:$0xff]
  %v422 = vld [vmem:[%s2 + $0x168] sm:$0xff]
  %v423 = vld [vmem:[%s2 + $0x170] sm:$0xff]
  %v424 = vld [vmem:[%s2 + $0x178] sm:$0xff]
  %v425 = vld [vmem:[%s2 + $0x180] sm:$0xff]
  %v426 = vld [vmem:[%s2 + $0x188] sm:$0xff]
  %v427 = vld [vmem:[%s2 + $0x190] sm:$0xff]
  %v428 = vld [vmem:[%s2 + $0x198] sm:$0xff]
  %v429 = vld [vmem:[%s2 + $0x1a0] sm:$0xff]
  %v430 = vld [vmem:[%s2 + $0x1a8] sm:$0xff]
  %v431 = vld [vmem:[%s2 + $0x1b0] sm:$0xff]
  %v432 = vld [vmem:[%s2 + $0x1b8] sm:$0xff]
  %v433 = vld [vmem:[%s2 + $0x1c0] sm:$0xff]
  %v434 = vld [vmem:[%s2 + $0x1c8] sm:$0xff]
  %v435 = vld [vmem:[%s2 + $0x1d0] sm:$0xff]
  %v436 = vld [vmem:[%s2 + $0x1d8] sm:$0xff]
  %v437 = vld [vmem:[%s2 + $0x1e0] sm:$0xff]
  %v438 = vld [vmem:[%s2 + $0x1e8] sm:$0xff]
  %v439 = vld [vmem:[%s2 + $0x1f0] sm:$0xff]
  %v440 = vld [vmem:[%s2 + $0x1f8] sm:$0xff]
  %v441 = vld [vmem:[#allocation3] sm:$0xff]
  %v442 = vld [vmem:[#allocation4] sm:$0xff]
  %v443 = vld [vmem:[#allocation2] sm:$0xff]
  %v444 = vld [vmem:[#allocation2 + $0x8] sm:$0xff]
  %v445 = vld [vmem:[#allocation2 + $0x10] sm:$0xff]
  %v446 = vld [vmem:[#allocation2 + $0x18] sm:$0xff]
  %447 = vmatprep.subr.mxu0 %v438
  %448 = vmatpush1.msra.mxu0 %v437
  %449 = vmatprep.subr.mxu0 %v434
  %450 = vmatpush1.msra.mxu0 %v433
  %451 = vmatprep.subr.mxu0 %v430
  %452 = vmatpush1.msra.mxu0 %v429
  %453 = vmatprep.subr.mxu0 %v426
  %454 = vmatpush1.msra.mxu0 %v425
  %455 = vmatprep.subr.mxu0 %v422
  %456 = vmatpush1.msra.mxu0 %v421
  %457 = vmatprep.subr.mxu0 %v418
  %458 = vmatpush1.msra.mxu0 %v417
  %459 = vmatprep.subr.mxu0 %v414
  %460 = vmatpush1.msra.mxu0 %v413
  %461 = vmatprep.subr.mxu0 %v410
  %462 = vmatpush1.msra.mxu0 %v409
  %463 = vmatprep.subr.mxu0 %v406
  %464 = vmatpush1.msra.mxu0 %v405
  %465 = vmatprep.subr.mxu0 %v402
  %466 = vmatpush1.msra.mxu0 %v401
  %467 = vmatprep.subr.mxu0 %v398
  %468 = vmatpush1.msra.mxu0 %v397
  %469 = vmatprep.subr.mxu0 %v394
  %470 = vmatpush1.msra.mxu0 %v393
  %471 = vmatprep.subr.mxu0 %v390
  %472 = vmatpush1.msra.mxu0 %v389
  %473 = vmatprep.subr.mxu0 %v386
  %474 = vmatpush1.msra.mxu0 %v385
  %475 = vmatprep.subr.mxu0 %v382
  %476 = vmatpush1.msra.mxu0 %v381
  %477 = vmatprep.subr.mxu0 %v378
  %478 = vmatpush1.msra.mxu0 %v377
  %479 = vmatprep.subr.mxu0 0.0
  %480 = vmatpush2.msra.mxu0 0.0
  %481 = vmatprep.subr.mxu0 0.0
  %482 = vmatpush2.msra.mxu0 0.0
  %483 = vmatprep.subr.mxu0 0.0
  %484 = vmatpush2.msra.mxu0 0.0
  %485 = vmatprep.subr.mxu0 0.0
  %486 = vmatpush2.msra.mxu0 0.0
  %487 = vmatprep.subr.mxu0 0.0
  %488 = vmatpush2.msra.mxu0 0.0
  %489 = vmatprep.subr.mxu0 0.0
  %490 = vmatpush2.msra.mxu0 0.0
  %491 = vmatprep.subr.mxu0 0.0
  %492 = vmatpush2.msra.mxu0 0.0
  %493 = vmatprep.subr.mxu0 0.0
  %494 = vmatpush2.msra.mxu0 0.0
  %495 = vmatprep.subr.mxu0 0.0
  %496 = vmatpush2.msra.mxu0 0.0
  %497 = vmatprep.subr.mxu0 0.0
  %498 = vmatpush2.msra.mxu0 0.0
  %499 = vmatprep.subr.mxu0 0.0
  %500 = vmatpush2.msra.mxu0 0.0
  %501 = vmatprep.subr.mxu0 0.0
  %502 = vmatpush2.msra.mxu0 0.0
  %503 = vmatprep.subr.mxu0 0.0
  %504 = vmatpush2.msra.mxu0 0.0
  %505 = vmatprep.subr.mxu0 0.0
  %506 = vmatpush2.msra.mxu0 0.0
  %507 = vmatprep.subr.mxu0 0.0
  %508 = vmatpush2.msra.mxu0 0.0
  %509 = vmatprep.subr.mxu0 0.0
  %510 = vmatpush2.msra.mxu0 0.0
  %511 = vmatprep.mubr.f32.mxu0 0.0
  %512 = vmatmul.mubr.f32.gmra.mxu0 %v441
  %v513 = vpop.f32.mrf.mxu0
  %v514 = vadd.f32 0.0, %v513
  %v515 = vpop.f32.mrf.mxu0
  %v516 = vadd.f32 0.0, %v515
  %517 = vdwg.mxu0
  %518 = vmatprep.subr.mxu0 %v440
  %519 = vmatpush1.msra.mxu0 %v439
  %520 = vmatprep.subr.mxu0 %v436
  %521 = vmatpush1.msra.mxu0 %v435
  %522 = vmatprep.subr.mxu0 %v432
  %523 = vmatpush1.msra.mxu0 %v431
  %524 = vmatprep.subr.mxu0 %v428
  %525 = vmatpush1.msra.mxu0 %v427
  %526 = vmatprep.subr.mxu0 %v424
  %527 = vmatpush1.msra.mxu0 %v423
  %528 = vmatprep.subr.mxu0 %v420
  %529 = vmatpush1.msra.mxu0 %v419
  %530 = vmatprep.subr.mxu0 %v416
  %531 = vmatpush1.msra.mxu0 %v415
  %532 = vmatprep.subr.mxu0 %v412
  %533 = vmatpush1.msra.mxu0 %v411
  %534 = vmatprep.subr.mxu0 %v408
  %535 = vmatpush1.msra.mxu0 %v407
  %536 = vmatprep.subr.mxu0 %v404
  %537 = vmatpush1.msra.mxu0 %v403
  %538 = vmatprep.subr.mxu0 %v400
  %539 = vmatpush1.msra.mxu0 %v399
  %540 = vmatprep.subr.mxu0 %v396
  %541 = vmatpush1.msra.mxu0 %v395
  %542 = vmatprep.subr.mxu0 %v392
  %543 = vmatpush1.msra.mxu0 %v391
  %544 = vmatprep.subr.mxu0 %v388
  %545 = vmatpush1.msra.mxu0 %v387
  %546 = vmatprep.subr.mxu0 %v384
  %547 = vmatpush1.msra.mxu0 %v383
  %548 = vmatprep.subr.mxu0 %v380
  %549 = vmatpush1.msra.mxu0 %v379
  %550 = vmatprep.subr.mxu0 0.0
  %551 = vmatpush2.msra.mxu0 0.0
  %552 = vmatprep.subr.mxu0 0.0
  %553 = vmatpush2.msra.mxu0 0.0
  %554 = vmatprep.subr.mxu0 0.0
  %555 = vmatpush2.msra.mxu0 0.0
  %556 = vmatprep.subr.mxu0 0.0
  %557 = vmatpush2.msra.mxu0 0.0
  %558 = vmatprep.subr.mxu0 0.0
  %559 = vmatpush2.msra.mxu0 0.0
  %560 = vmatprep.subr.mxu0 0.0
  %561 = vmatpush2.msra.mxu0 0.0
  %562 = vmatprep.subr.mxu0 0.0
  %563 = vmatpush2.msra.mxu0 0.0
  %564 = vmatprep.subr.mxu0 0.0
  %565 = vmatpush2.msra.mxu0 0.0
  %566 = vmatprep.subr.mxu0 0.0
  %567 = vmatpush2.msra.mxu0 0.0
  %568 = vmatprep.subr.mxu0 0.0
  %569 = vmatpush2.msra.mxu0 0.0
  %570 = vmatprep.subr.mxu0 0.0
  %571 = vmatpush2.msra.mxu0 0.0
  %572 = vmatprep.subr.mxu0 0.0
  %573 = vmatpush2.msra.mxu0 0.0
  %574 = vmatprep.subr.mxu0 0.0
  %575 = vmatpush2.msra.mxu0 0.0
  %576 = vmatprep.subr.mxu0 0.0
  %577 = vmatpush2.msra.mxu0 0.0
  %578 = vmatprep.subr.mxu0 0.0
  %579 = vmatpush2.msra.mxu0 0.0
  %580 = vmatprep.subr.mxu0 0.0
  %581 = vmatpush2.msra.mxu0 0.0
  %582 = vmatprep.mubr.f32.mxu0 0.0
  %583 = vmatmul.mubr.f32.gmra.mxu0 %v441
  %v584 = vpop.f32.mrf.mxu0
  %v585 = vadd.f32 0.0, %v584
  %v586 = vpop.f32.mrf.mxu0
  %v587 = vadd.f32 0.0, %v586
  %588 = vdwg.mxu0
  %v589 = vadd.f32 %v443, %v514
  %v590 = vadd.f32 %v444, %v516
  %v591 = vadd.f32 %v445, %v585
  %v592 = vadd.f32 %v446, %v587
  %v593 = vmul.f32 %v589, 0.5
  %v594 = vtanh.pop %v593
  %v595 = vadd.f32 %v594, 1.0
  %v596 = vmul.f32 %v595, 0.5
  %v597 = vmul.f32 %v590, 0.5
  %v598 = vtanh.pop %v597
  %v599 = vadd.f32 %v598, 1.0
  %v600 = vmul.f32 %v599, 0.5
  %v601 = vtanh.pop %v591
  %v602 = vmul.f32 %v592, 0.5
  %v603 = vtanh.pop %v602
  %v604 = vadd.f32 %v603, 1.0
  %v605 = vmul.f32 %v604, 0.5
  %v606 = vmul.f32 %v600, %v442
  %v607 = vmul.f32 %v596, %v601
  %v608 = vadd.f32 %v606, %v607
  %v609 = vtanh.pop %v608
  %v610 = vmul.f32 %v605, %v609
  %611 = vst [vmem:[%s4] sm:$0xff] %v610
  %s612 = scalar_lea.vmem [#allocation2], 32
  %v613 = vld [vmem:[%s612] sm:$0xff]
  %v614 = vld [vmem:[%s612 + $0x8] sm:$0xff]
  %v615 = vld [vmem:[%s612 + $0x10] sm:$0xff]
  %v616 = vld [vmem:[%s612 + $0x18] sm:$0xff]
  %617 = vmatprep.subr.mxu0 %v438
  %618 = vmatpush1.msra.mxu0 %v437
  %619 = vmatprep.subr.mxu0 %v434
  %620 = vmatpush1.msra.mxu0 %v433
  %621 = vmatprep.subr.mxu0 %v430
  %622 = vmatpush1.msra.mxu0 %v429
  %623 = vmatprep.subr.mxu0 %v426
  %624 = vmatpush1.msra.mxu0 %v425
  %625 = vmatprep.subr.mxu0 %v422
  %626 = vmatpush1.msra.mxu0 %v421
  %627 = vmatprep.subr.mxu0 %v418
  %628 = vmatpush1.msra.mxu0 %v417
  %629 = vmatprep.subr.mxu0 %v414
  %630 = vmatpush1.msra.mxu0 %v413
  %631 = vmatprep.subr.mxu0 %v410
  %632 = vmatpush1.msra.mxu0 %v409
  %633 = vmatprep.subr.mxu0 %v406
  %634 = vmatpush1.msra.mxu0 %v405
  %635 = vmatprep.subr.mxu0 %v402
  %636 = vmatpush1.msra.mxu0 %v401
  %637 = vmatprep.subr.mxu0 %v398
  %638 = vmatpush1.msra.mxu0 %v397
  %639 = vmatprep.subr.mxu0 %v394
  %640 = vmatpush1.msra.mxu0 %v393
  %641 = vmatprep.subr.mxu0 %v390
  %642 = vmatpush1.msra.mxu0 %v389
  %643 = vmatprep.subr.mxu0 %v386
  %644 = vmatpush1.msra.mxu0 %v385
  %645 = vmatprep.subr.mxu0 %v382
  %646 = vmatpush1.msra.mxu0 %v381
  %647 = vmatprep.subr.mxu0 %v378
  %648 = vmatpush1.msra.mxu0 %v377
  %649 = vmatprep.subr.mxu0 0.0
  %650 = vmatpush2.msra.mxu0 0.0
  %651 = vmatprep.subr.mxu0 0.0
  %652 = vmatpush2.msra.mxu0 0.0
  %653 = vmatprep.subr.mxu0 0.0
  %654 = vmatpush2.msra.mxu0 0.0
  %655 = vmatprep.subr.mxu0 0.0
  %656 = vmatpush2.msra.mxu0 0.0
  %657 = vmatprep.subr.mxu0 0.0
  %658 = vmatpush2.msra.mxu0 0.0
  %659 = vmatprep.subr.mxu0 0.0
  %660 = vmatpush2.msra.mxu0 0.0
  %661 = vmatprep.subr.mxu0 0.0
  %662 = vmatpush2.msra.mxu0 0.0
  %663 = vmatprep.subr.mxu0 0.0
  %664 = vmatpush2.msra.mxu0 0.0
  %665 = vmatprep.subr.mxu0 0.0
  %666 = vmatpush2.msra.mxu0 0.0
  %667 = vmatprep.subr.mxu0 0.0
  %668 = vmatpush2.msra.mxu0 0.0
  %669 = vmatprep.subr.mxu0 0.0
  %670 = vmatpush2.msra.mxu0 0.0
  %671 = vmatprep.subr.mxu0 0.0
  %672 = vmatpush2.msra.mxu0 0.0
  %673 = vmatprep.subr.mxu0 0.0
  %674 = vmatpush2.msra.mxu0 0.0
  %675 = vmatprep.subr.mxu0 0.0
  %676 = vmatpush2.msra.mxu0 0.0
  %677 = vmatprep.subr.mxu0 0.0
  %678 = vmatpush2.msra.mxu0 0.0
  %679 = vmatprep.subr.mxu0 0.0
  %680 = vmatpush2.msra.mxu0 0.0
  %681 = vmatprep.mubr.f32.mxu0 0.0
  %682 = vmatmul.mubr.f32.gmra.mxu0 %v610
  %v683 = vpop.f32.mrf.mxu0
  %v684 = vadd.f32 0.0, %v683
  %v685 = vpop.f32.mrf.mxu0
  %v686 = vadd.f32 0.0, %v685
  %687 = vdwg.mxu0
  %688 = vmatprep.subr.mxu0 %v440
  %689 = vmatpush1.msra.mxu0 %v439
  %690 = vmatprep.subr.mxu0 %v436
  %691 = vmatpush1.msra.mxu0 %v435
  %692 = vmatprep.subr.mxu0 %v432
  %693 = vmatpush1.msra.mxu0 %v431
  %694 = vmatprep.subr.mxu0 %v428
  %695 = vmatpush1.msra.mxu0 %v427
  %696 = vmatprep.subr.mxu0 %v424
  %697 = vmatpush1.msra.mxu0 %v423
  %698 = vmatprep.subr.mxu0 %v420
  %699 = vmatpush1.msra.mxu0 %v419
  %700 = vmatprep.subr.mxu0 %v416
  %701 = vmatpush1.msra.mxu0 %v415
  %702 = vmatprep.subr.mxu0 %v412
  %703 = vmatpush1.msra.mxu0 %v411
  %704 = vmatprep.subr.mxu0 %v408
  %705 = vmatpush1.msra.mxu0 %v407
  %706 = vmatprep.subr.mxu0 %v404
  %707 = vmatpush1.msra.mxu0 %v403
  %708 = vmatprep.subr.mxu0 %v400
  %709 = vmatpush1.msra.mxu0 %v399
  %710 = vmatprep.subr.mxu0 %v396
  %711 = vmatpush1.msra.mxu0 %v395
  %712 = vmatprep.subr.mxu0 %v392
  %713 = vmatpush1.msra.mxu0 %v391
  %714 = vmatprep.subr.mxu0 %v388
  %715 = vmatpush1.msra.mxu0 %v387
  %716 = vmatprep.subr.mxu0 %v384
  %717 = vmatpush1.msra.mxu0 %v383
  %718 = vmatprep.subr.mxu0 %v380
  %719 = vmatpush1.msra.mxu0 %v379
  %720 = vmatprep.subr.mxu0 0.0
  %721 = vmatpush2.msra.mxu0 0.0
  %722 = vmatprep.subr.mxu0 0.0
  %723 = vmatpush2.msra.mxu0 0.0
  %724 = vmatprep.subr.mxu0 0.0
  %725 = vmatpush2.msra.mxu0 0.0
  %726 = vmatprep.subr.mxu0 0.0
  %727 = vmatpush2.msra.mxu0 0.0
  %728 = vmatprep.subr.mxu0 0.0
  %729 = vmatpush2.msra.mxu0 0.0
  %730 = vmatprep.subr.mxu0 0.0
  %731 = vmatpush2.msra.mxu0 0.0
  %732 = vmatprep.subr.mxu0 0.0
  %733 = vmatpush2.msra.mxu0 0.0
  %734 = vmatprep.subr.mxu0 0.0
  %735 = vmatpush2.msra.mxu0 0.0
  %736 = vmatprep.subr.mxu0 0.0
  %737 = vmatpush2.msra.mxu0 0.0
  %738 = vmatprep.subr.mxu0 0.0
  %739 = vmatpush2.msra.mxu0 0.0
  %740 = vmatprep.subr.mxu0 0.0
  %741 = vmatpush2.msra.mxu0 0.0
  %742 = vmatprep.subr.mxu0 0.0
  %743 = vmatpush2.msra.mxu0 0.0
  %744 = vmatprep.subr.mxu0 0.0
  %745 = vmatpush2.msra.mxu0 0.0
  %746 = vmatprep.subr.mxu0 0.0
  %747 = vmatpush2.msra.mxu0 0.0
  %748 = vmatprep.subr.mxu0 0.0
  %749 = vmatpush2.msra.mxu0 0.0
  %750 = vmatprep.subr.mxu0 0.0
  %751 = vmatpush2.msra.mxu0 0.0
  %752 = vmatprep.mubr.f32.mxu0 0.0
  %753 = vmatmul.mubr.f32.gmra.mxu0 %v610
  %v754 = vpop.f32.mrf.mxu0
  %v755 = vadd.f32 0.0, %v754
  %v756 = vpop.f32.mrf.mxu0
  %v757 = vadd.f32 0.0, %v756
  %758 = vdwg.mxu0
  %v759 = vadd.f32 %v613, %v684
  %v760 = vadd.f32 %v614, %v686
  %v761 = vadd.f32 %v615, %v755
  %v762 = vadd.f32 %v616, %v757
  %v763 = vmul.f32 %v759, 0.5
  %v764 = vtanh.pop %v763
  %v765 = vadd.f32 %v764, 1.0
  %v766 = vmul.f32 %v765, 0.5
  %v767 = vmul.f32 %v760, 0.5
  %v768 = vtanh.pop %v767
  %v769 = vadd.f32 %v768, 1.0
  %v770 = vmul.f32 %v769, 0.5
  %v771 = vtanh.pop %v761
  %v772 = vmul.f32 %v762, 0.5
  %v773 = vtanh.pop %v772
  %v774 = vadd.f32 %v773, 1.0
  %v775 = vmul.f32 %v774, 0.5
  %v776 = vmul.f32 %v770, %v608
  %v777 = vmul.f32 %v766, %v771
  %v778 = vadd.f32 %v776, %v777
  %v779 = vtanh.pop %v778
  %v780 = vmul.f32 %v775, %v779
  %s781 = scalar_lea.vmem %s4, 8
  %782 = vst [vmem:[%s781] sm:$0xff] %v780
  %s783 = scalar_lea.vmem [#allocation2], 64
  %v784 = vld [vmem:[%s783] sm:$0xff]
  %v785 = vld [vmem:[%s783 + $0x8] sm:$0xff]
  %v786 = vld [vmem:[%s783 + $0x10] sm:$0xff]
  %v787 = vld [vmem:[%s783 + $0x18] sm:$0xff]
  %788 = vmatprep.subr.mxu0 %v438
  %789 = vmatpush1.msra.mxu0 %v437
  %790 = vmatprep.subr.mxu0 %v434
  %791 = vmatpush1.msra.mxu0 %v433
  %792 = vmatprep.subr.mxu0 %v430
  %793 = vmatpush1.msra.mxu0 %v429
  %794 = vmatprep.subr.mxu0 %v426
  %795 = vmatpush1.msra.mxu0 %v425
  %796 = vmatprep.subr.mxu0 %v422
  %797 = vmatpush1.msra.mxu0 %v421
  %798 = vmatprep.subr.mxu0 %v418
  %799 = vmatpush1.msra.mxu0 %v417
  %800 = vmatprep.subr.mxu0 %v414
  %801 = vmatpush1.msra.mxu0 %v413
  %802 = vmatprep.subr.mxu0 %v410
  %803 = vmatpush1.msra.mxu0 %v409
  %804 = vmatprep.subr.mxu0 %v406
  %805 = vmatpush1.msra.mxu0 %v405
  %806 = vmatprep.subr.mxu0 %v402
  %807 = vmatpush1.msra.mxu0 %v401
  %808 = vmatprep.subr.mxu0 %v398
  %809 = vmatpush1.msra.mxu0 %v397
  %810 = vmatprep.subr.mxu0 %v394
  %811 = vmatpush1.msra.mxu0 %v393
  %812 = vmatprep.subr.mxu0 %v390
  %813 = vmatpush1.msra.mxu0 %v389
  %814 = vmatprep.subr.mxu0 %v386
  %815 = vmatpush1.msra.mxu0 %v385
  %816 = vmatprep.subr.mxu0 %v382
  %817 = vmatpush1.msra.mxu0 %v381
  %818 = vmatprep.subr.mxu0 %v378
  %819 = vmatpush1.msra.mxu0 %v377
  %820 = vmatprep.subr.mxu0 0.0
  %821 = vmatpush2.msra.mxu0 0.0
  %822 = vmatprep.subr.mxu0 0.0
  %823 = vmatpush2.msra.mxu0 0.0
  %824 = vmatprep.subr.mxu0 0.0
  %825 = vmatpush2.msra.mxu0 0.0
  %826 = vmatprep.subr.mxu0 0.0
  %827 = vmatpush2.msra.mxu0 0.0
  %828 = vmatprep.subr.mxu0 0.0
  %829 = vmatpush2.msra.mxu0 0.0
  %830 = vmatprep.subr.mxu0 0.0
  %831 = vmatpush2.msra.mxu0 0.0
  %832 = vmatprep.subr.mxu0 0.0
  %833 = vmatpush2.msra.mxu0 0.0
  %834 = vmatprep.subr.mxu0 0.0
  %835 = vmatpush2.msra.mxu0 0.0
  %836 = vmatprep.subr.mxu0 0.0
  %837 = vmatpush2.msra.mxu0 0.0
  %838 = vmatprep.subr.mxu0 0.0
  %839 = vmatpush2.msra.mxu0 0.0
  %840 = vmatprep.subr.mxu0 0.0
  %841 = vmatpush2.msra.mxu0 0.0
  %842 = vmatprep.subr.mxu0 0.0
  %843 = vmatpush2.msra.mxu0 0.0
  %844 = vmatprep.subr.mxu0 0.0
  %845 = vmatpush2.msra.mxu0 0.0
  %846 = vmatprep.subr.mxu0 0.0
  %847 = vmatpush2.msra.mxu0 0.0
  %848 = vmatprep.subr.mxu0 0.0
  %849 = vmatpush2.msra.mxu0 0.0
  %850 = vmatprep.subr.mxu0 0.0
  %851 = vmatpush2.msra.mxu0 0.0
  %852 = vmatprep.mubr.f32.mxu0 0.0
  %853 = vmatmul.mubr.f32.gmra.mxu0 %v780
  %v854 = vpop.f32.mrf.mxu0
  %v855 = vadd.f32 0.0, %v854
  %v856 = vpop.f32.mrf.mxu0
  %v857 = vadd.f32 0.0, %v856
  %858 = vdwg.mxu0
  %859 = vmatprep.subr.mxu0 %v440
  %860 = vmatpush1.msra.mxu0 %v439
  %861 = vmatprep.subr.mxu0 %v436
  %862 = vmatpush1.msra.mxu0 %v435
  %863 = vmatprep.subr.mxu0 %v432
  %864 = vmatpush1.msra.mxu0 %v431
  %865 = vmatprep.subr.mxu0 %v428
  %866 = vmatpush1.msra.mxu0 %v427
  %867 = vmatprep.subr.mxu0 %v424
  %868 = vmatpush1.msra.mxu0 %v423
  %869 = vmatprep.subr.mxu0 %v420
  %870 = vmatpush1.msra.mxu0 %v419
  %871 = vmatprep.subr.mxu0 %v416
  %872 = vmatpush1.msra.mxu0 %v415
  %873 = vmatprep.subr.mxu0 %v412
  %874 = vmatpush1.msra.mxu0 %v411
  %875 = vmatprep.subr.mxu0 %v408
  %876 = vmatpush1.msra.mxu0 %v407
  %877 = vmatprep.subr.mxu0 %v404
  %878 = vmatpush1.msra.mxu0 %v403
  %879 = vmatprep.subr.mxu0 %v400
  %880 = vmatpush1.msra.mxu0 %v399
  %881 = vmatprep.subr.mxu0 %v396
  %882 = vmatpush1.msra.mxu0 %v395
  %883 = vmatprep.subr.mxu0 %v392
  %884 = vmatpush1.msra.mxu0 %v391
  %885 = vmatprep.subr.mxu0 %v388
  %886 = vmatpush1.msra.mxu0 %v387
  %887 = vmatprep.subr.mxu0 %v384
  %888 = vmatpush1.msra.mxu0 %v383
  %889 = vmatprep.subr.mxu0 %v380
  %890 = vmatpush1.msra.mxu0 %v379
  %891 = vmatprep.subr.mxu0 0.0
  %892 = vmatpush2.msra.mxu0 0.0
  %893 = vmatprep.subr.mxu0 0.0
  %894 = vmatpush2.msra.mxu0 0.0
  %895 = vmatprep.subr.mxu0 0.0
  %896 = vmatpush2.msra.mxu0 0.0
  %897 = vmatprep.subr.mxu0 0.0
  %898 = vmatpush2.msra.mxu0 0.0
  %899 = vmatprep.subr.mxu0 0.0
  %900 = vmatpush2.msra.mxu0 0.0
  %901 = vmatprep.subr.mxu0 0.0
  %902 = vmatpush2.msra.mxu0 0.0
  %903 = vmatprep.subr.mxu0 0.0
  %904 = vmatpush2.msra.mxu0 0.0
  %905 = vmatprep.subr.mxu0 0.0
  %906 = vmatpush2.msra.mxu0 0.0
  %907 = vmatprep.subr.mxu0 0.0
  %908 = vmatpush2.msra.mxu0 0.0
  %909 = vmatprep.subr.mxu0 0.0
  %910 = vmatpush2.msra.mxu0 0.0
  %911 = vmatprep.subr.mxu0 0.0
  %912 = vmatpush2.msra.mxu0 0.0
  %913 = vmatprep.subr.mxu0 0.0
  %914 = vmatpush2.msra.mxu0 0.0
  %915 = vmatprep.subr.mxu0 0.0
  %916 = vmatpush2.msra.mxu0 0.0
  %917 = vmatprep.subr.mxu0 0.0
  %918 = vmatpush2.msra.mxu0 0.0
  %919 = vmatprep.subr.mxu0 0.0
  %920 = vmatpush2.msra.mxu0 0.0
  %921 = vmatprep.subr.mxu0 0.0
  %922 = vmatpush2.msra.mxu0 0.0
  %923 = vmatprep.mubr.f32.mxu0 0.0
  %924 = vmatmul.mubr.f32.gmra.mxu0 %v780
  %v925 = vpop.f32.mrf.mxu0
  %v926 = vadd.f32 0.0, %v925
  %v927 = vpop.f32.mrf.mxu0
  %v928 = vadd.f32 0.0, %v927
  %929 = vdwg.mxu0
  %v930 = vadd.f32 %v784, %v855
  %v931 = vadd.f32 %v785, %v857
  %v932 = vadd.f32 %v786, %v926
  %v933 = vadd.f32 %v787, %v928
  %v934 = vmul.f32 %v930, 0.5
  %v935 = vtanh.pop %v934
  %v936 = vadd.f32 %v935, 1.0
  %v937 = vmul.f32 %v936, 0.5
  %v938 = vmul.f32 %v931, 0.5
  %v939 = vtanh.pop %v938
  %v940 = vadd.f32 %v939, 1.0
  %v941 = vmul.f32 %v940, 0.5
  %v942 = vtanh.pop %v932
  %v943 = vmul.f32 %v933, 0.5
  %v944 = vtanh.pop %v943
  %v945 = vadd.f32 %v944, 1.0
  %v946 = vmul.f32 %v945, 0.5
  %v947 = vmul.f32 %v941, %v778
  %v948 = vmul.f32 %v937, %v942
  %v949 = vadd.f32 %v947, %v948
  %v950 = vtanh.pop %v949
  %v951 = vmul.f32 %v946, %v950
  %s952 = scalar_lea.vmem %s4, 16
  %953 = vst [vmem:[%s952] sm:$0xff] %v951
  %s954 = scalar_lea.vmem [#allocation2], 96
  %v955 = vld [vmem:[%s954] sm:$0xff]
  %v956 = vld [vmem:[%s954 + $0x8] sm:$0xff]
  %v957 = vld [vmem:[%s954 + $0x10] sm:$0xff]
  %v958 = vld [vmem:[%s954 + $0x18] sm:$0xff]
  %959 = vmatprep.subr.mxu0 %v438
  %960 = vmatpush1.msra.mxu0 %v437
  %961 = vmatprep.subr.mxu0 %v434
  %962 = vmatpush1.msra.mxu0 %v433
  %963 = vmatprep.subr.mxu0 %v430
  %964 = vmatpush1.msra.mxu0 %v429
  %965 = vmatprep.subr.mxu0 %v426
  %966 = vmatpush1.msra.mxu0 %v425
  %967 = vmatprep.subr.mxu0 %v422
  %968 = vmatpush1.msra.mxu0 %v421
  %969 = vmatprep.subr.mxu0 %v418
  %970 = vmatpush1.msra.mxu0 %v417
  %971 = vmatprep.subr.mxu0 %v414
  %972 = vmatpush1.msra.mxu0 %v413
  %973 = vmatprep.subr.mxu0 %v410
  %974 = vmatpush1.msra.mxu0 %v409
  %975 = vmatprep.subr.mxu0 %v406
  %976 = vmatpush1.msra.mxu0 %v405
  %977 = vmatprep.subr.mxu0 %v402
  %978 = vmatpush1.msra.mxu0 %v401
  %979 = vmatprep.subr.mxu0 %v398
  %980 = vmatpush1.msra.mxu0 %v397
  %981 = vmatprep.subr.mxu0 %v394
  %982 = vmatpush1.msra.mxu0 %v393
  %983 = vmatprep.subr.mxu0 %v390
  %984 = vmatpush1.msra.mxu0 %v389
  %985 = vmatprep.subr.mxu0 %v386
  %986 = vmatpush1.msra.mxu0 %v385
  %987 = vmatprep.subr.mxu0 %v382
  %988 = vmatpush1.msra.mxu0 %v381
  %989 = vmatprep.subr.mxu0 %v378
  %990 = vmatpush1.msra.mxu0 %v377
  %991 = vmatprep.subr.mxu0 0.0
  %992 = vmatpush2.msra.mxu0 0.0
  %993 = vmatprep.subr.mxu0 0.0
  %994 = vmatpush2.msra.mxu0 0.0
  %995 = vmatprep.subr.mxu0 0.0
  %996 = vmatpush2.msra.mxu0 0.0
  %997 = vmatprep.subr.mxu0 0.0
  %998 = vmatpush2.msra.mxu0 0.0
  %999 = vmatprep.subr.mxu0 0.0
  %1000 = vmatpush2.msra.mxu0 0.0
  %1001 = vmatprep.subr.mxu0 0.0
  %1002 = vmatpush2.msra.mxu0 0.0
  %1003 = vmatprep.subr.mxu0 0.0
  %1004 = vmatpush2.msra.mxu0 0.0
  %1005 = vmatprep.subr.mxu0 0.0
  %1006 = vmatpush2.msra.mxu0 0.0
  %1007 = vmatprep.subr.mxu0 0.0
  %1008 = vmatpush2.msra.mxu0 0.0
  %1009 = vmatprep.subr.mxu0 0.0
  %1010 = vmatpush2.msra.mxu0 0.0
  %1011 = vmatprep.subr.mxu0 0.0
  %1012 = vmatpush2.msra.mxu0 0.0
  %1013 = vmatprep.subr.mxu0 0.0
  %1014 = vmatpush2.msra.mxu0 0.0
  %1015 = vmatprep.subr.mxu0 0.0
  %1016 = vmatpush2.msra.mxu0 0.0
  %1017 = vmatprep.subr.mxu0 0.0
  %1018 = vmatpush2.msra.mxu0 0.0
  %1019 = vmatprep.subr.mxu0 0.0
  %1020 = vmatpush2.msra.mxu0 0.0
  %1021 = vmatprep.subr.mxu0 0.0
  %1022 = vmatpush2.msra.mxu0 0.0
  %1023 = vmatprep.mubr.f32.mxu0 0.0
  %1024 = vmatmul.mubr.f32.gmra.mxu0 %v951
  %v1025 = vpop.f32.mrf.mxu0
  %v1026 = vadd.f32 0.0, %v1025
  %v1027 = vpop.f32.mrf.mxu0
  %v1028 = vadd.f32 0.0, %v1027
  %1029 = vdwg.mxu0
  %1030 = vmatprep.subr.mxu0 %v440
  %1031 = vmatpush1.msra.mxu0 %v439
  %1032 = vmatprep.subr.mxu0 %v436
  %1033 = vmatpush1.msra.mxu0 %v435
  %1034 = vmatprep.subr.mxu0 %v432
  %1035 = vmatpush1.msra.mxu0 %v431
  %1036 = vmatprep.subr.mxu0 %v428
  %1037 = vmatpush1.msra.mxu0 %v427
  %1038 = vmatprep.subr.mxu0 %v424
  %1039 = vmatpush1.msra.mxu0 %v423
  %1040 = vmatprep.subr.mxu0 %v420
  %1041 = vmatpush1.msra.mxu0 %v419
  %1042 = vmatprep.subr.mxu0 %v416
  %1043 = vmatpush1.msra.mxu0 %v415
  %1044 = vmatprep.subr.mxu0 %v412
  %1045 = vmatpush1.msra.mxu0 %v411
  %1046 = vmatprep.subr.mxu0 %v408
  %1047 = vmatpush1.msra.mxu0 %v407
  %1048 = vmatprep.subr.mxu0 %v404
  %1049 = vmatpush1.msra.mxu0 %v403
  %1050 = vmatprep.subr.mxu0 %v400
  %1051 = vmatpush1.msra.mxu0 %v399
  %1052 = vmatprep.subr.mxu0 %v396
  %1053 = vmatpush1.msra.mxu0 %v395
  %1054 = vmatprep.subr.mxu0 %v392
  %1055 = vmatpush1.msra.mxu0 %v391
  %1056 = vmatprep.subr.mxu0 %v388
  %1057 = vmatpush1.msra.mxu0 %v387
  %1058 = vmatprep.subr.mxu0 %v384
  %1059 = vmatpush1.msra.mxu0 %v383
  %1060 = vmatprep.subr.mxu0 %v380
  %1061 = vmatpush1.msra.mxu0 %v379
  %1062 = vmatprep.subr.mxu0 0.0
  %1063 = vmatpush2.msra.mxu0 0.0
  %1064 = vmatprep.subr.mxu0 0.0
  %1065 = vmatpush2.msra.mxu0 0.0
  %1066 = vmatprep.subr.mxu0 0.0
  %1067 = vmatpush2.msra.mxu0 0.0
  %1068 = vmatprep.subr.mxu0 0.0
  %1069 = vmatpush2.msra.mxu0 0.0
  %1070 = vmatprep.subr.mxu0 0.0
  %1071 = vmatpush2.msra.mxu0 0.0
  %1072 = vmatprep.subr.mxu0 0.0
  %1073 = vmatpush2.msra.mxu0 0.0
  %1074 = vmatprep.subr.mxu0 0.0
  %1075 = vmatpush2.msra.mxu0 0.0
  %1076 = vmatprep.subr.mxu0 0.0
  %1077 = vmatpush2.msra.mxu0 0.0
  %1078 = vmatprep.subr.mxu0 0.0
  %1079 = vmatpush2.msra.mxu0 0.0
  %1080 = vmatprep.subr.mxu0 0.0
  %1081 = vmatpush2.msra.mxu0 0.0
  %1082 = vmatprep.subr.mxu0 0.0
  %1083 = vmatpush2.msra.mxu0 0.0
  %1084 = vmatprep.subr.mxu0 0.0
  %1085 = vmatpush2.msra.mxu0 0.0
  %1086 = vmatprep.subr.mxu0 0.0
  %1087 = vmatpush2.msra.mxu0 0.0
  %1088 = vmatprep.subr.mxu0 0.0
  %1089 = vmatpush2.msra.mxu0 0.0
  %1090 = vmatprep.subr.mxu0 0.0
  %1091 = vmatpush2.msra.mxu0 0.0
  %1092 = vmatprep.subr.mxu0 0.0
  %1093 = vmatpush2.msra.mxu0 0.0
  %1094 = vmatprep.mubr.f32.mxu0 0.0
  %1095 = vmatmul.mubr.f32.gmra.mxu0 %v951
  %v1096 = vpop.f32.mrf.mxu0
  %v1097 = vadd.f32 0.0, %v1096
  %v1098 = vpop.f32.mrf.mxu0
  %v1099 = vadd.f32 0.0, %v1098
  %1100 = vdwg.mxu0
  %v1101 = vadd.f32 %v955, %v1026
  %v1102 = vadd.f32 %v956, %v1028
  %v1103 = vadd.f32 %v957, %v1097
  %v1104 = vadd.f32 %v958, %v1099
  %v1105 = vmul.f32 %v1101, 0.5
  %v1106 = vtanh.pop %v1105
  %v1107 = vadd.f32 %v1106, 1.0
  %v1108 = vmul.f32 %v1107, 0.5
  %v1109 = vmul.f32 %v1102, 0.5
  %v1110 = vtanh.pop %v1109
  %v1111 = vadd.f32 %v1110, 1.0
  %v1112 = vmul.f32 %v1111, 0.5
  %v1113 = vtanh.pop %v1103
  %v1114 = vmul.f32 %v1104, 0.5
  %v1115 = vtanh.pop %v1114
  %v1116 = vadd.f32 %v1115, 1.0
  %v1117 = vmul.f32 %v1116, 0.5
  %v1118 = vmul.f32 %v1112, %v949
  %v1119 = vmul.f32 %v1108, %v1113
  %v1120 = vadd.f32 %v1118, %v1119
  %v1121 = vtanh.pop %v1120
  %v1122 = vmul.f32 %v1117, %v1121
  %s1123 = scalar_lea.vmem %s4, 24
  %1124 = vst [vmem:[%s1123] sm:$0xff] %v1122
  %s1125 = scalar_lea.vmem [#allocation2], 128
  %v1126 = vld [vmem:[%s1125] sm:$0xff]
  %v1127 = vld [vmem:[%s1125 + $0x8] sm:$0xff]
  %v1128 = vld [vmem:[%s1125 + $0x10] sm:$0xff]
  %v1129 = vld [vmem:[%s1125 + $0x18] sm:$0xff]
  %1130 = vmatprep.subr.mxu0 %v438
  %1131 = vmatpush1.msra.mxu0 %v437
  %1132 = vmatprep.subr.mxu0 %v434
  %1133 = vmatpush1.msra.mxu0 %v433
  %1134 = vmatprep.subr.mxu0 %v430
  %1135 = vmatpush1.msra.mxu0 %v429
  %1136 = vmatprep.subr.mxu0 %v426
  %1137 = vmatpush1.msra.mxu0 %v425
  %1138 = vmatprep.subr.mxu0 %v422
  %1139 = vmatpush1.msra.mxu0 %v421
  %1140 = vmatprep.subr.mxu0 %v418
  %1141 = vmatpush1.msra.mxu0 %v417
  %1142 = vmatprep.subr.mxu0 %v414
  %1143 = vmatpush1.msra.mxu0 %v413
  %1144 = vmatprep.subr.mxu0 %v410
  %1145 = vmatpush1.msra.mxu0 %v409
  %1146 = vmatprep.subr.mxu0 %v406
  %1147 = vmatpush1.msra.mxu0 %v405
  %1148 = vmatprep.subr.mxu0 %v402
  %1149 = vmatpush1.msra.mxu0 %v401
  %1150 = vmatprep.subr.mxu0 %v398
  %1151 = vmatpush1.msra.mxu0 %v397
  %1152 = vmatprep.subr.mxu0 %v394
  %1153 = vmatpush1.msra.mxu0 %v393
  %1154 = vmatprep.subr.mxu0 %v390
  %1155 = vmatpush1.msra.mxu0 %v389
  %1156 = vmatprep.subr.mxu0 %v386
  %1157 = vmatpush1.msra.mxu0 %v385
  %1158 = vmatprep.subr.mxu0 %v382
  %1159 = vmatpush1.msra.mxu0 %v381
  %1160 = vmatprep.subr.mxu0 %v378
  %1161 = vmatpush1.msra.mxu0 %v377
  %1162 = vmatprep.subr.mxu0 0.0
  %1163 = vmatpush2.msra.mxu0 0.0
  %1164 = vmatprep.subr.mxu0 0.0
  %1165 = vmatpush2.msra.mxu0 0.0
  %1166 = vmatprep.subr.mxu0 0.0
  %1167 = vmatpush2.msra.mxu0 0.0
  %1168 = vmatprep.subr.mxu0 0.0
  %1169 = vmatpush2.msra.mxu0 0.0
  %1170 = vmatprep.subr.mxu0 0.0
  %1171 = vmatpush2.msra.mxu0 0.0
  %1172 = vmatprep.subr.mxu0 0.0
  %1173 = vmatpush2.msra.mxu0 0.0
  %1174 = vmatprep.subr.mxu0 0.0
  %1175 = vmatpush2.msra.mxu0 0.0
  %1176 = vmatprep.subr.mxu0 0.0
  %1177 = vmatpush2.msra.mxu0 0.0
  %1178 = vmatprep.subr.mxu0 0.0
  %1179 = vmatpush2.msra.mxu0 0.0
  %1180 = vmatprep.subr.mxu0 0.0
  %1181 = vmatpush2.msra.mxu0 0.0
  %1182 = vmatprep.subr.mxu0 0.0
  %1183 = vmatpush2.msra.mxu0 0.0
  %1184 = vmatprep.subr.mxu0 0.0
  %1185 = vmatpush2.msra.mxu0 0.0
  %1186 = vmatprep.subr.mxu0 0.0
  %1187 = vmatpush2.msra.mxu0 0.0
  %1188 = vmatprep.subr.mxu0 0.0
  %1189 = vmatpush2.msra.mxu0 0.0
  %1190 = vmatprep.subr.mxu0 0.0
  %1191 = vmatpush2.msra.mxu0 0.0
  %1192 = vmatprep.subr.mxu0 0.0
  %1193 = vmatpush2.msra.mxu0 0.0
  %1194 = vmatprep.mubr.f32.mxu0 0.0
  %1195 = vmatmul.mubr.f32.gmra.mxu0 %v1122
  %v1196 = vpop.f32.mrf.mxu0
  %v1197 = vadd.f32 0.0, %v1196
  %v1198 = vpop.f32.mrf.mxu0
  %v1199 = vadd.f32 0.0, %v1198
  %1200 = vdwg.mxu0
  %1201 = vmatprep.subr.mxu0 %v440
  %1202 = vmatpush1.msra.mxu0 %v439
  %1203 = vmatprep.subr.mxu0 %v436
  %1204 = vmatpush1.msra.mxu0 %v435
  %1205 = vmatprep.subr.mxu0 %v432
  %1206 = vmatpush1.msra.mxu0 %v431
  %1207 = vmatprep.subr.mxu0 %v428
  %1208 = vmatpush1.msra.mxu0 %v427
  %1209 = vmatprep.subr.mxu0 %v424
  %1210 = vmatpush1.msra.mxu0 %v423
  %1211 = vmatprep.subr.mxu0 %v420
  %1212 = vmatpush1.msra.mxu0 %v419
  %1213 = vmatprep.subr.mxu0 %v416
  %1214 = vmatpush1.msra.mxu0 %v415
  %1215 = vmatprep.subr.mxu0 %v412
  %1216 = vmatpush1.msra.mxu0 %v411
  %1217 = vmatprep.subr.mxu0 %v408
  %1218 = vmatpush1.msra.mxu0 %v407
  %1219 = vmatprep.subr.mxu0 %v404
  %1220 = vmatpush1.msra.mxu0 %v403
  %1221 = vmatprep.subr.mxu0 %v400
  %1222 = vmatpush1.msra.mxu0 %v399
  %1223 = vmatprep.subr.mxu0 %v396
  %1224 = vmatpush1.msra.mxu0 %v395
  %1225 = vmatprep.subr.mxu0 %v392
  %1226 = vmatpush1.msra.mxu0 %v391
  %1227 = vmatprep.subr.mxu0 %v388
  %1228 = vmatpush1.msra.mxu0 %v387
  %1229 = vmatprep.subr.mxu0 %v384
  %1230 = vmatpush1.msra.mxu0 %v383
  %1231 = vmatprep.subr.mxu0 %v380
  %1232 = vmatpush1.msra.mxu0 %v379
  %1233 = vmatprep.subr.mxu0 0.0
  %1234 = vmatpush2.msra.mxu0 0.0
  %1235 = vmatprep.subr.mxu0 0.0
  %1236 = vmatpush2.msra.mxu0 0.0
  %1237 = vmatprep.subr.mxu0 0.0
  %1238 = vmatpush2.msra.mxu0 0.0
  %1239 = vmatprep.subr.mxu0 0.0
  %1240 = vmatpush2.msra.mxu0 0.0
  %1241 = vmatprep.subr.mxu0 0.0
  %1242 = vmatpush2.msra.mxu0 0.0
  %1243 = vmatprep.subr.mxu0 0.0
  %1244 = vmatpush2.msra.mxu0 0.0
  %1245 = vmatprep.subr.mxu0 0.0
  %1246 = vmatpush2.msra.mxu0 0.0
  %1247 = vmatprep.subr.mxu0 0.0
  %1248 = vmatpush2.msra.mxu0 0.0
  %1249 = vmatprep.subr.mxu0 0.0
  %1250 = vmatpush2.msra.mxu0 0.0
  %1251 = vmatprep.subr.mxu0 0.0
  %1252 = vmatpush2.msra.mxu0 0.0
  %1253 = vmatprep.subr.mxu0 0.0
  %1254 = vmatpush2.msra.mxu0 0.0
  %1255 = vmatprep.subr.mxu0 0.0
  %1256 = vmatpush2.msra.mxu0 0.0
  %1257 = vmatprep.subr.mxu0 0.0
  %1258 = vmatpush2.msra.mxu0 0.0
  %1259 = vmatprep.subr.mxu0 0.0
  %1260 = vmatpush2.msra.mxu0 0.0
  %1261 = vmatprep.subr.mxu0 0.0
  %1262 = vmatpush2.msra.mxu0 0.0
  %1263 = vmatprep.subr.mxu0 0.0
  %1264 = vmatpush2.msra.mxu0 0.0
  %1265 = vmatprep.mubr.f32.mxu0 0.0
  %1266 = vmatmul.mubr.f32.gmra.mxu0 %v1122
  %v1267 = vpop.f32.mrf.mxu0
  %v1268 = vadd.f32 0.0, %v1267
  %v1269 = vpop.f32.mrf.mxu0
  %v1270 = vadd.f32 0.0, %v1269
  %1271 = vdwg.mxu0
  %v1272 = vadd.f32 %v1126, %v1197
  %v1273 = vadd.f32 %v1127, %v1199
  %v1274 = vadd.f32 %v1128, %v1268
  %v1275 = vadd.f32 %v1129, %v1270
  %v1276 = vmul.f32 %v1272, 0.5
  %v1277 = vtanh.pop %v1276
  %v1278 = vadd.f32 %v1277, 1.0
  %v1279 = vmul.f32 %v1278, 0.5
  %v1280 = vmul.f32 %v1273, 0.5
  %v1281 = vtanh.pop %v1280
  %v1282 = vadd.f32 %v1281, 1.0
  %v1283 = vmul.f32 %v1282, 0.5
  %v1284 = vtanh.pop %v1274
  %v1285 = vmul.f32 %v1275, 0.5
  %v1286 = vtanh.pop %v1285
  %v1287 = vadd.f32 %v1286, 1.0
  %v1288 = vmul.f32 %v1287, 0.5
  %v1289 = vmul.f32 %v1283, %v1120
  %v1290 = vmul.f32 %v1279, %v1284
  %v1291 = vadd.f32 %v1289, %v1290
  %v1292 = vtanh.pop %v1291
  %v1293 = vmul.f32 %v1288, %v1292
  %s1294 = scalar_lea.vmem %s4, 32
  %1295 = vst [vmem:[%s1294] sm:$0xff] %v1293
  %s1296 = scalar_lea.vmem [#allocation2], 160
  %v1297 = vld [vmem:[%s1296] sm:$0xff]
  %v1298 = vld [vmem:[%s1296 + $0x8] sm:$0xff]
  %v1299 = vld [vmem:[%s1296 + $0x10] sm:$0xff]
  %v1300 = vld [vmem:[%s1296 + $0x18] sm:$0xff]
  %1301 = vmatprep.subr.mxu0 %v438
  %1302 = vmatpush1.msra.mxu0 %v437
  %1303 = vmatprep.subr.mxu0 %v434
  %1304 = vmatpush1.msra.mxu0 %v433
  %1305 = vmatprep.subr.mxu0 %v430
  %1306 = vmatpush1.msra.mxu0 %v429
  %1307 = vmatprep.subr.mxu0 %v426
  %1308 = vmatpush1.msra.mxu0 %v425
  %1309 = vmatprep.subr.mxu0 %v422
  %1310 = vmatpush1.msra.mxu0 %v421
  %1311 = vmatprep.subr.mxu0 %v418
  %1312 = vmatpush1.msra.mxu0 %v417
  %1313 = vmatprep.subr.mxu0 %v414
  %1314 = vmatpush1.msra.mxu0 %v413
  %1315 = vmatprep.subr.mxu0 %v410
  %1316 = vmatpush1.msra.mxu0 %v409
  %1317 = vmatprep.subr.mxu0 %v406
  %1318 = vmatpush1.msra.mxu0 %v405
  %1319 = vmatprep.subr.mxu0 %v402
  %1320 = vmatpush1.msra.mxu0 %v401
  %1321 = vmatprep.subr.mxu0 %v398
  %1322 = vmatpush1.msra.mxu0 %v397
  %1323 = vmatprep.subr.mxu0 %v394
  %1324 = vmatpush1.msra.mxu0 %v393
  %1325 = vmatprep.subr.mxu0 %v390
  %1326 = vmatpush1.msra.mxu0 %v389
  %1327 = vmatprep.subr.mxu0 %v386
  %1328 = vmatpush1.msra.mxu0 %v385
  %1329 = vmatprep.subr.mxu0 %v382
  %1330 = vmatpush1.msra.mxu0 %v381
  %1331 = vmatprep.subr.mxu0 %v378
  %1332 = vmatpush1.msra.mxu0 %v377
  %1333 = vmatprep.subr.mxu0 0.0
  %1334 = vmatpush2.msra.mxu0 0.0
  %1335 = vmatprep.subr.mxu0 0.0
  %1336 = vmatpush2.msra.mxu0 0.0
  %1337 = vmatprep.subr.mxu0 0.0
  %1338 = vmatpush2.msra.mxu0 0.0
  %1339 = vmatprep.subr.mxu0 0.0
  %1340 = vmatpush2.msra.mxu0 0.0
  %1341 = vmatprep.subr.mxu0 0.0
  %1342 = vmatpush2.msra.mxu0 0.0
  %1343 = vmatprep.subr.mxu0 0.0
  %1344 = vmatpush2.msra.mxu0 0.0
  %1345 = vmatprep.subr.mxu0 0.0
  %1346 = vmatpush2.msra.mxu0 0.0
  %1347 = vmatprep.subr.mxu0 0.0
  %1348 = vmatpush2.msra.mxu0 0.0
  %1349 = vmatprep.subr.mxu0 0.0
  %1350 = vmatpush2.msra.mxu0 0.0
  %1351 = vmatprep.subr.mxu0 0.0
  %1352 = vmatpush2.msra.mxu0 0.0
  %1353 = vmatprep.subr.mxu0 0.0
  %1354 = vmatpush2.msra.mxu0 0.0
  %1355 = vmatprep.subr.mxu0 0.0
  %1356 = vmatpush2.msra.mxu0 0.0
  %1357 = vmatprep.subr.mxu0 0.0
  %1358 = vmatpush2.msra.mxu0 0.0
  %1359 = vmatprep.subr.mxu0 0.0
  %1360 = vmatpush2.msra.mxu0 0.0
  %1361 = vmatprep.subr.mxu0 0.0
  %1362 = vmatpush2.msra.mxu0 0.0
  %1363 = vmatprep.subr.mxu0 0.0
  %1364 = vmatpush2.msra.mxu0 0.0
  %1365 = vmatprep.mubr.f32.mxu0 0.0
  %1366 = vmatmul.mubr.f32.gmra.mxu0 %v1293
  %v1367 = vpop.f32.mrf.mxu0
  %v1368 = vadd.f32 0.0, %v1367
  %v1369 = vpop.f32.mrf.mxu0
  %v1370 = vadd.f32 0.0, %v1369
  %1371 = vdwg.mxu0
  %1372 = vmatprep.subr.mxu0 %v440
  %1373 = vmatpush1.msra.mxu0 %v439
  %1374 = vmatprep.subr.mxu0 %v436
  %1375 = vmatpush1.msra.mxu0 %v435
  %1376 = vmatprep.subr.mxu0 %v432
  %1377 = vmatpush1.msra.mxu0 %v431
  %1378 = vmatprep.subr.mxu0 %v428
  %1379 = vmatpush1.msra.mxu0 %v427
  %1380 = vmatprep.subr.mxu0 %v424
  %1381 = vmatpush1.msra.mxu0 %v423
  %1382 = vmatprep.subr.mxu0 %v420
  %1383 = vmatpush1.msra.mxu0 %v419
  %1384 = vmatprep.subr.mxu0 %v416
  %1385 = vmatpush1.msra.mxu0 %v415
  %1386 = vmatprep.subr.mxu0 %v412
  %1387 = vmatpush1.msra.mxu0 %v411
  %1388 = vmatprep.subr.mxu0 %v408
  %1389 = vmatpush1.msra.mxu0 %v407
  %1390 = vmatprep.subr.mxu0 %v404
  %1391 = vmatpush1.msra.mxu0 %v403
  %1392 = vmatprep.subr.mxu0 %v400
  %1393 = vmatpush1.msra.mxu0 %v399
  %1394 = vmatprep.subr.mxu0 %v396
  %1395 = vmatpush1.msra.mxu0 %v395
  %1396 = vmatprep.subr.mxu0 %v392
  %1397 = vmatpush1.msra.mxu0 %v391
  %1398 = vmatprep.subr.mxu0 %v388
  %1399 = vmatpush1.msra.mxu0 %v387
  %1400 = vmatprep.subr.mxu0 %v384
  %1401 = vmatpush1.msra.mxu0 %v383
  %1402 = vmatprep.subr.mxu0 %v380
  %1403 = vmatpush1.msra.mxu0 %v379
  %1404 = vmatprep.subr.mxu0 0.0
  %1405 = vmatpush2.msra.mxu0 0.0
  %1406 = vmatprep.subr.mxu0 0.0
  %1407 = vmatpush2.msra.mxu0 0.0
  %1408 = vmatprep.subr.mxu0 0.0
  %1409 = vmatpush2.msra.mxu0 0.0
  %1410 = vmatprep.subr.mxu0 0.0
  %1411 = vmatpush2.msra.mxu0 0.0
  %1412 = vmatprep.subr.mxu0 0.0
  %1413 = vmatpush2.msra.mxu0 0.0
  %1414 = vmatprep.subr.mxu0 0.0
  %1415 = vmatpush2.msra.mxu0 0.0
  %1416 = vmatprep.subr.mxu0 0.0
  %1417 = vmatpush2.msra.mxu0 0.0
  %1418 = vmatprep.subr.mxu0 0.0
  %1419 = vmatpush2.msra.mxu0 0.0
  %1420 = vmatprep.subr.mxu0 0.0
  %1421 = vmatpush2.msra.mxu0 0.0
  %1422 = vmatprep.subr.mxu0 0.0
  %1423 = vmatpush2.msra.mxu0 0.0
  %1424 = vmatprep.subr.mxu0 0.0
  %1425 = vmatpush2.msra.mxu0 0.0
  %1426 = vmatprep.subr.mxu0 0.0
  %1427 = vmatpush2.msra.mxu0 0.0
  %1428 = vmatprep.subr.mxu0 0.0
  %1429 = vmatpush2.msra.mxu0 0.0
  %1430 = vmatprep.subr.mxu0 0.0
  %1431 = vmatpush2.msra.mxu0 0.0
  %1432 = vmatprep.subr.mxu0 0.0
  %1433 = vmatpush2.msra.mxu0 0.0
  %1434 = vmatprep.subr.mxu0 0.0
  %1435 = vmatpush2.msra.mxu0 0.0
  %1436 = vmatprep.mubr.f32.mxu0 0.0
  %1437 = vmatmul.mubr.f32.gmra.mxu0 %v1293
  %v1438 = vpop.f32.mrf.mxu0
  %v1439 = vadd.f32 0.0, %v1438
  %v1440 = vpop.f32.mrf.mxu0
  %v1441 = vadd.f32 0.0, %v1440
  %1442 = vdwg.mxu0
  %v1443 = vadd.f32 %v1297, %v1368
  %v1444 = vadd.f32 %v1298, %v1370
  %v1445 = vadd.f32 %v1299, %v1439
  %v1446 = vadd.f32 %v1300, %v1441
  %v1447 = vmul.f32 %v1443, 0.5
  %v1448 = vtanh.pop %v1447
  %v1449 = vadd.f32 %v1448, 1.0
  %v1450 = vmul.f32 %v1449, 0.5
  %v1451 = vmul.f32 %v1444, 0.5
  %v1452 = vtanh.pop %v1451
  %v1453 = vadd.f32 %v1452, 1.0
  %v1454 = vmul.f32 %v1453, 0.5
  %v1455 = vtanh.pop %v1445
  %v1456 = vmul.f32 %v1446, 0.5
  %v1457 = vtanh.pop %v1456
  %v1458 = vadd.f32 %v1457, 1.0
  %v1459 = vmul.f32 %v1458, 0.5
  %v1460 = vmul.f32 %v1454, %v1291
  %v1461 = vmul.f32 %v1450, %v1455
  %v1462 = vadd.f32 %v1460, %v1461
  %v1463 = vtanh.pop %v1462
  %v1464 = vmul.f32 %v1459, %v1463
  %s1465 = scalar_lea.vmem %s4, 40
  %1466 = vst [vmem:[%s1465] sm:$0xff] %v1464
  %s1467 = scalar_lea.vmem [#allocation2], 192
  %v1468 = vld [vmem:[%s1467] sm:$0xff]
  %v1469 = vld [vmem:[%s1467 + $0x8] sm:$0xff]
  %v1470 = vld [vmem:[%s1467 + $0x10] sm:$0xff]
  %v1471 = vld [vmem:[%s1467 + $0x18] sm:$0xff]
  %1472 = vmatprep.subr.mxu0 %v438
  %1473 = vmatpush1.msra.mxu0 %v437
  %1474 = vmatprep.subr.mxu0 %v434
  %1475 = vmatpush1.msra.mxu0 %v433
  %1476 = vmatprep.subr.mxu0 %v430
  %1477 = vmatpush1.msra.mxu0 %v429
  %1478 = vmatprep.subr.mxu0 %v426
  %1479 = vmatpush1.msra.mxu0 %v425
  %1480 = vmatprep.subr.mxu0 %v422
  %1481 = vmatpush1.msra.mxu0 %v421
  %1482 = vmatprep.subr.mxu0 %v418
  %1483 = vmatpush1.msra.mxu0 %v417
  %1484 = vmatprep.subr.mxu0 %v414
  %1485 = vmatpush1.msra.mxu0 %v413
  %1486 = vmatprep.subr.mxu0 %v410
  %1487 = vmatpush1.msra.mxu0 %v409
  %1488 = vmatprep.subr.mxu0 %v406
  %1489 = vmatpush1.msra.mxu0 %v405
  %1490 = vmatprep.subr.mxu0 %v402
  %1491 = vmatpush1.msra.mxu0 %v401
  %1492 = vmatprep.subr.mxu0 %v398
  %1493 = vmatpush1.msra.mxu0 %v397
  %1494 = vmatprep.subr.mxu0 %v394
  %1495 = vmatpush1.msra.mxu0 %v393
  %1496 = vmatprep.subr.mxu0 %v390
  %1497 = vmatpush1.msra.mxu0 %v389
  %1498 = vmatprep.subr.mxu0 %v386
  %1499 = vmatpush1.msra.mxu0 %v385
  %1500 = vmatprep.subr.mxu0 %v382
  %1501 = vmatpush1.msra.mxu0 %v381
  %1502 = vmatprep.subr.mxu0 %v378
  %1503 = vmatpush1.msra.mxu0 %v377
  %1504 = vmatprep.subr.mxu0 0.0
  %1505 = vmatpush2.msra.mxu0 0.0
  %1506 = vmatprep.subr.mxu0 0.0
  %1507 = vmatpush2.msra.mxu0 0.0
  %1508 = vmatprep.subr.mxu0 0.0
  %1509 = vmatpush2.msra.mxu0 0.0
  %1510 = vmatprep.subr.mxu0 0.0
  %1511 = vmatpush2.msra.mxu0 0.0
  %1512 = vmatprep.subr.mxu0 0.0
  %1513 = vmatpush2.msra.mxu0 0.0
  %1514 = vmatprep.subr.mxu0 0.0
  %1515 = vmatpush2.msra.mxu0 0.0
  %1516 = vmatprep.subr.mxu0 0.0
  %1517 = vmatpush2.msra.mxu0 0.0
  %1518 = vmatprep.subr.mxu0 0.0
  %1519 = vmatpush2.msra.mxu0 0.0
  %1520 = vmatprep.subr.mxu0 0.0
  %1521 = vmatpush2.msra.mxu0 0.0
  %1522 = vmatprep.subr.mxu0 0.0
  %1523 = vmatpush2.msra.mxu0 0.0
  %1524 = vmatprep.subr.mxu0 0.0
  %1525 = vmatpush2.msra.mxu0 0.0
  %1526 = vmatprep.subr.mxu0 0.0
  %1527 = vmatpush2.msra.mxu0 0.0
  %1528 = vmatprep.subr.mxu0 0.0
  %1529 = vmatpush2.msra.mxu0 0.0
  %1530 = vmatprep.subr.mxu0 0.0
  %1531 = vmatpush2.msra.mxu0 0.0
  %1532 = vmatprep.subr.mxu0 0.0
  %1533 = vmatpush2.msra.mxu0 0.0
  %1534 = vmatprep.subr.mxu0 0.0
  %1535 = vmatpush2.msra.mxu0 0.0
  %1536 = vmatprep.mubr.f32.mxu0 0.0
  %1537 = vmatmul.mubr.f32.gmra.mxu0 %v1464
  %v1538 = vpop.f32.mrf.mxu0
  %v1539 = vadd.f32 0.0, %v1538
  %v1540 = vpop.f32.mrf.mxu0
  %v1541 = vadd.f32 0.0, %v1540
  %1542 = vdwg.mxu0
  %1543 = vmatprep.subr.mxu0 %v440
  %1544 = vmatpush1.msra.mxu0 %v439
  %1545 = vmatprep.subr.mxu0 %v436
  %1546 = vmatpush1.msra.mxu0 %v435
  %1547 = vmatprep.subr.mxu0 %v432
  %1548 = vmatpush1.msra.mxu0 %v431
  %1549 = vmatprep.subr.mxu0 %v428
  %1550 = vmatpush1.msra.mxu0 %v427
  %1551 = vmatprep.subr.mxu0 %v424
  %1552 = vmatpush1.msra.mxu0 %v423
  %1553 = vmatprep.subr.mxu0 %v420
  %1554 = vmatpush1.msra.mxu0 %v419
  %1555 = vmatprep.subr.mxu0 %v416
  %1556 = vmatpush1.msra.mxu0 %v415
  %1557 = vmatprep.subr.mxu0 %v412
  %1558 = vmatpush1.msra.mxu0 %v411
  %1559 = vmatprep.subr.mxu0 %v408
  %1560 = vmatpush1.msra.mxu0 %v407
  %1561 = vmatprep.subr.mxu0 %v404
  %1562 = vmatpush1.msra.mxu0 %v403
  %1563 = vmatprep.subr.mxu0 %v400
  %1564 = vmatpush1.msra.mxu0 %v399
  %1565 = vmatprep.subr.mxu0 %v396
  %1566 = vmatpush1.msra.mxu0 %v395
  %1567 = vmatprep.subr.mxu0 %v392
  %1568 = vmatpush1.msra.mxu0 %v391
  %1569 = vmatprep.subr.mxu0 %v388
  %1570 = vmatpush1.msra.mxu0 %v387
  %1571 = vmatprep.subr.mxu0 %v384
  %1572 = vmatpush1.msra.mxu0 %v383
  %1573 = vmatprep.subr.mxu0 %v380
  %1574 = vmatpush1.msra.mxu0 %v379
  %1575 = vmatprep.subr.mxu0 0.0
  %1576 = vmatpush2.msra.mxu0 0.0
  %1577 = vmatprep.subr.mxu0 0.0
  %1578 = vmatpush2.msra.mxu0 0.0
  %1579 = vmatprep.subr.mxu0 0.0
  %1580 = vmatpush2.msra.mxu0 0.0
  %1581 = vmatprep.subr.mxu0 0.0
  %1582 = vmatpush2.msra.mxu0 0.0
  %1583 = vmatprep.subr.mxu0 0.0
  %1584 = vmatpush2.msra.mxu0 0.0
  %1585 = vmatprep.subr.mxu0 0.0
  %1586 = vmatpush2.msra.mxu0 0.0
  %1587 = vmatprep.subr.mxu0 0.0
  %1588 = vmatpush2.msra.mxu0 0.0
  %1589 = vmatprep.subr.mxu0 0.0
  %1590 = vmatpush2.msra.mxu0 0.0
  %1591 = vmatprep.subr.mxu0 0.0
  %1592 = vmatpush2.msra.mxu0 0.0
  %1593 = vmatprep.subr.mxu0 0.0
  %1594 = vmatpush2.msra.mxu0 0.0
  %1595 = vmatprep.subr.mxu0 0.0
  %1596 = vmatpush2.msra.mxu0 0.0
  %1597 = vmatprep.subr.mxu0 0.0
  %1598 = vmatpush2.msra.mxu0 0.0
  %1599 = vmatprep.subr.mxu0 0.0
  %1600 = vmatpush2.msra.mxu0 0.0
  %1601 = vmatprep.subr.mxu0 0.0
  %1602 = vmatpush2.msra.mxu0 0.0
  %1603 = vmatprep.subr.mxu0 0.0
  %1604 = vmatpush2.msra.mxu0 0.0
  %1605 = vmatprep.subr.mxu0 0.0
  %1606 = vmatpush2.msra.mxu0 0.0
  %1607 = vmatprep.mubr.f32.mxu0 0.0
  %1608 = vmatmul.mubr.f32.gmra.mxu0 %v1464
  %v1609 = vpop.f32.mrf.mxu0
  %v1610 = vadd.f32 0.0, %v1609
  %v1611 = vpop.f32.mrf.mxu0
  %v1612 = vadd.f32 0.0, %v1611
  %1613 = vdwg.mxu0
  %v1614 = vadd.f32 %v1468, %v1539
  %v1615 = vadd.f32 %v1469, %v1541
  %v1616 = vadd.f32 %v1470, %v1610
  %v1617 = vadd.f32 %v1471, %v1612
  %v1618 = vmul.f32 %v1614, 0.5
  %v1619 = vtanh.pop %v1618
  %v1620 = vadd.f32 %v1619, 1.0
  %v1621 = vmul.f32 %v1620, 0.5
  %v1622 = vmul.f32 %v1615, 0.5
  %v1623 = vtanh.pop %v1622
  %v1624 = vadd.f32 %v1623, 1.0
  %v1625 = vmul.f32 %v1624, 0.5
  %v1626 = vtanh.pop %v1616
  %v1627 = vmul.f32 %v1617, 0.5
  %v1628 = vtanh.pop %v1627
  %v1629 = vadd.f32 %v1628, 1.0
  %v1630 = vmul.f32 %v1629, 0.5
  %v1631 = vmul.f32 %v1625, %v1462
  %v1632 = vmul.f32 %v1621, %v1626
  %v1633 = vadd.f32 %v1631, %v1632
  %v1634 = vtanh.pop %v1633
  %v1635 = vmul.f32 %v1630, %v1634
  %s1636 = scalar_lea.vmem %s4, 48
  %1637 = vst [vmem:[%s1636] sm:$0xff] %v1635
  %s1638 = scalar_lea.vmem [#allocation2], 224
  %v1639 = vld [vmem:[%s1638] sm:$0xff]
  %v1640 = vld [vmem:[%s1638 + $0x8] sm:$0xff]
  %v1641 = vld [vmem:[%s1638 + $0x10] sm:$0xff]
  %v1642 = vld [vmem:[%s1638 + $0x18] sm:$0xff]
  %1643 = vmatprep.subr.mxu0 %v438
  %1644 = vmatpush1.msra.mxu0 %v437
  %1645 = vmatprep.subr.mxu0 %v434
  %1646 = vmatpush1.msra.mxu0 %v433
  %1647 = vmatprep.subr.mxu0 %v430
  %1648 = vmatpush1.msra.mxu0 %v429
  %1649 = vmatprep.subr.mxu0 %v426
  %1650 = vmatpush1.msra.mxu0 %v425
  %1651 = vmatprep.subr.mxu0 %v422
  %1652 = vmatpush1.msra.mxu0 %v421
  %1653 = vmatprep.subr.mxu0 %v418
  %1654 = vmatpush1.msra.mxu0 %v417
  %1655 = vmatprep.subr.mxu0 %v414
  %1656 = vmatpush1.msra.mxu0 %v413
  %1657 = vmatprep.subr.mxu0 %v410
  %1658 = vmatpush1.msra.mxu0 %v409
  %1659 = vmatprep.subr.mxu0 %v406
  %1660 = vmatpush1.msra.mxu0 %v405
  %1661 = vmatprep.subr.mxu0 %v402
  %1662 = vmatpush1.msra.mxu0 %v401
  %1663 = vmatprep.subr.mxu0 %v398
  %1664 = vmatpush1.msra.mxu0 %v397
  %1665 = vmatprep.subr.mxu0 %v394
  %1666 = vmatpush1.msra.mxu0 %v393
  %1667 = vmatprep.subr.mxu0 %v390
  %1668 = vmatpush1.msra.mxu0 %v389
  %1669 = vmatprep.subr.mxu0 %v386
  %1670 = vmatpush1.msra.mxu0 %v385
  %1671 = vmatprep.subr.mxu0 %v382
  %1672 = vmatpush1.msra.mxu0 %v381
  %1673 = vmatprep.subr.mxu0 %v378
  %1674 = vmatpush1.msra.mxu0 %v377
  %1675 = vmatprep.subr.mxu0 0.0
  %1676 = vmatpush2.msra.mxu0 0.0
  %1677 = vmatprep.subr.mxu0 0.0
  %1678 = vmatpush2.msra.mxu0 0.0
  %1679 = vmatprep.subr.mxu0 0.0
  %1680 = vmatpush2.msra.mxu0 0.0
  %1681 = vmatprep.subr.mxu0 0.0
  %1682 = vmatpush2.msra.mxu0 0.0
  %1683 = vmatprep.subr.mxu0 0.0
  %1684 = vmatpush2.msra.mxu0 0.0
  %1685 = vmatprep.subr.mxu0 0.0
  %1686 = vmatpush2.msra.mxu0 0.0
  %1687 = vmatprep.subr.mxu0 0.0
  %1688 = vmatpush2.msra.mxu0 0.0
  %1689 = vmatprep.subr.mxu0 0.0
  %1690 = vmatpush2.msra.mxu0 0.0
  %1691 = vmatprep.subr.mxu0 0.0
  %1692 = vmatpush2.msra.mxu0 0.0
  %1693 = vmatprep.subr.mxu0 0.0
  %1694 = vmatpush2.msra.mxu0 0.0
  %1695 = vmatprep.subr.mxu0 0.0
  %1696 = vmatpush2.msra.mxu0 0.0
  %1697 = vmatprep.subr.mxu0 0.0
  %1698 = vmatpush2.msra.mxu0 0.0
  %1699 = vmatprep.subr.mxu0 0.0
  %1700 = vmatpush2.msra.mxu0 0.0
  %1701 = vmatprep.subr.mxu0 0.0
  %1702 = vmatpush2.msra.mxu0 0.0
  %1703 = vmatprep.subr.mxu0 0.0
  %1704 = vmatpush2.msra.mxu0 0.0
  %1705 = vmatprep.subr.mxu0 0.0
  %1706 = vmatpush2.msra.mxu0 0.0
  %1707 = vmatprep.mubr.f32.mxu0 0.0
  %1708 = vmatmul.mubr.f32.gmra.mxu0 %v1635
  %v1709 = vpop.f32.mrf.mxu0
  %v1710 = vadd.f32 0.0, %v1709
  %v1711 = vpop.f32.mrf.mxu0
  %v1712 = vadd.f32 0.0, %v1711
  %1713 = vdwg.mxu0
  %1714 = vmatprep.subr.mxu0 %v440
  %1715 = vmatpush1.msra.mxu0 %v439
  %1716 = vmatprep.subr.mxu0 %v436
  %1717 = vmatpush1.msra.mxu0 %v435
  %1718 = vmatprep.subr.mxu0 %v432
  %1719 = vmatpush1.msra.mxu0 %v431
  %1720 = vmatprep.subr.mxu0 %v428
  %1721 = vmatpush1.msra.mxu0 %v427
  %1722 = vmatprep.subr.mxu0 %v424
  %1723 = vmatpush1.msra.mxu0 %v423
  %1724 = vmatprep.subr.mxu0 %v420
  %1725 = vmatpush1.msra.mxu0 %v419
  %1726 = vmatprep.subr.mxu0 %v416
  %1727 = vmatpush1.msra.mxu0 %v415
  %1728 = vmatprep.subr.mxu0 %v412
  %1729 = vmatpush1.msra.mxu0 %v411
  %1730 = vmatprep.subr.mxu0 %v408
  %1731 = vmatpush1.msra.mxu0 %v407
  %1732 = vmatprep.subr.mxu0 %v404
  %1733 = vmatpush1.msra.mxu0 %v403
  %1734 = vmatprep.subr.mxu0 %v400
  %1735 = vmatpush1.msra.mxu0 %v399
  %1736 = vmatprep.subr.mxu0 %v396
  %1737 = vmatpush1.msra.mxu0 %v395
  %1738 = vmatprep.subr.mxu0 %v392
  %1739 = vmatpush1.msra.mxu0 %v391
  %1740 = vmatprep.subr.mxu0 %v388
  %1741 = vmatpush1.msra.mxu0 %v387
  %1742 = vmatprep.subr.mxu0 %v384
  %1743 = vmatpush1.msra.mxu0 %v383
  %1744 = vmatprep.subr.mxu0 %v380
  %1745 = vmatpush1.msra.mxu0 %v379
  %1746 = vmatprep.subr.mxu0 0.0
  %1747 = vmatpush2.msra.mxu0 0.0
  %1748 = vmatprep.subr.mxu0 0.0
  %1749 = vmatpush2.msra.mxu0 0.0
  %1750 = vmatprep.subr.mxu0 0.0
  %1751 = vmatpush2.msra.mxu0 0.0
  %1752 = vmatprep.subr.mxu0 0.0
  %1753 = vmatpush2.msra.mxu0 0.0
  %1754 = vmatprep.subr.mxu0 0.0
  %1755 = vmatpush2.msra.mxu0 0.0
  %1756 = vmatprep.subr.mxu0 0.0
  %1757 = vmatpush2.msra.mxu0 0.0
  %1758 = vmatprep.subr.mxu0 0.0
  %1759 = vmatpush2.msra.mxu0 0.0
  %1760 = vmatprep.subr.mxu0 0.0
  %1761 = vmatpush2.msra.mxu0 0.0
  %1762 = vmatprep.subr.mxu0 0.0
  %1763 = vmatpush2.msra.mxu0 0.0
  %1764 = vmatprep.subr.mxu0 0.0
  %1765 = vmatpush2.msra.mxu0 0.0
  %1766 = vmatprep.subr.mxu0 0.0
  %1767 = vmatpush2.msra.mxu0 0.0
  %1768 = vmatprep.subr.mxu0 0.0
  %1769 = vmatpush2.msra.mxu0 0.0
  %1770 = vmatprep.subr.mxu0 0.0
  %1771 = vmatpush2.msra.mxu0 0.0
  %1772 = vmatprep.subr.mxu0 0.0
  %1773 = vmatpush2.msra.mxu0 0.0
  %1774 = vmatprep.subr.mxu0 0.0
  %1775 = vmatpush2.msra.mxu0 0.0
  %1776 = vmatprep.subr.mxu0 0.0
  %1777 = vmatpush2.msra.mxu0 0.0
  %1778 = vmatprep.mubr.f32.mxu0 0.0
  %1779 = vmatmul.mubr.f32.gmra.mxu0 %v1635
  %v1780 = vpop.f32.mrf.mxu0
  %v1781 = vadd.f32 0.0, %v1780
  %v1782 = vpop.f32.mrf.mxu0
  %v1783 = vadd.f32 0.0, %v1782
  %1784 = vdwg.mxu0
  %v1785 = vadd.f32 %v1639, %v1710
  %v1786 = vadd.f32 %v1640, %v1712
  %v1787 = vadd.f32 %v1641, %v1781
  %v1788 = vadd.f32 %v1642, %v1783
  %v1789 = vmul.f32 %v1785, 0.5
  %v1790 = vtanh.pop %v1789
  %v1791 = vadd.f32 %v1790, 1.0
  %v1792 = vmul.f32 %v1791, 0.5
  %v1793 = vmul.f32 %v1786, 0.5
  %v1794 = vtanh.pop %v1793
  %v1795 = vadd.f32 %v1794, 1.0
  %v1796 = vmul.f32 %v1795, 0.5
  %v1797 = vtanh.pop %v1787
  %v1798 = vmul.f32 %v1788, 0.5
  %v1799 = vtanh.pop %v1798
  %v1800 = vadd.f32 %v1799, 1.0
  %v1801 = vmul.f32 %v1800, 0.5
  %v1802 = vmul.f32 %v1796, %v1633
  %v1803 = vmul.f32 %v1792, %v1797
  %v1804 = vadd.f32 %v1802, %v1803
  %v1805 = vtanh.pop %v1804
  %v1806 = vmul.f32 %v1801, %v1805
  %s1807 = scalar_lea.vmem %s4, 56
  %1808 = vst [vmem:[%s1807] sm:$0xff] %v1806
  %1809 = vst [vmem:[#allocation3] sm:$0xff] %v1806
  %1810 = vst [vmem:[#allocation4] sm:$0xff] %v1804
  // Predicated region
  $region22: #{encoder_forward.2} parent=0 // pred_check
    %p1811 = pneg %p19
  $region23: #{encoder_forward.2} parent=0 // pred_check_branch
    %1813 = sbr.rel (%p1811) target = $region25
  $region24: #{encoder_forward.2} parent=0 // pred_region
    %1814 = vst [vmem:[%s5] sm:$0xff] %v1804
  $region25: #{encoder_forward.2} parent=0 // pred_fallthru
    _
  // Predicated region
  $region26: #{encoder_forward.2} parent=0 // pred_check
    _
  $region27: #{encoder_forward.2} parent=0 // pred_check_branch
    %1816 = sbr.rel (0) target = $region29
  $region28: #{encoder_forward.2} parent=0 // pred_region
    _
  $region29: #{encoder_forward.2} parent=0 // pred_fallthru
    _
  // Predicated region
  $region30: #{encoder_forward.2} parent=0 // pred_check
    _
  $region31: #{encoder_forward.2} parent=0 // pred_check_branch
    %1818 = sbr.rel (0) target = $region33
  $region32: #{encoder_forward.2} parent=0 // pred_region
    _
  $region33: #{encoder_forward.2} parent=0 // pred_fallthru
    _
  // Predicated region
  $region34: #{encoder_forward.2} parent=0 // pred_check
    _
  $region35: #{encoder_forward.2} parent=0 // pred_check_branch
    %1820 = sbr.rel (0) target = $region37
  $region36: #{encoder_forward.2} parent=0 // pred_region
    _
  $region37: #{encoder_forward.2} parent=0 // pred_fallthru
    _
  // Predicated region
  $region38: #{encoder_forward.2} parent=0 // pred_check
    _
  $region39: #{encoder_forward.2} parent=0 // pred_check_branch
    %1822 = sbr.rel (0) target = $region41
  $region40: #{encoder_forward.2} parent=0 // pred_region
    _
  $region41: #{encoder_forward.2} parent=0 // pred_fallthru
    _

</llo_original>
